<compile_context>
chip_gen: v7x
topology: tpu7x:2x2x1
jax: 0.10.0
libtpu: 0.0.40
codegen_flags: <defaults>
</compile_context>

<pallas_src>
import jax
import jax.numpy as jnp
from jax import lax
from jax.experimental import pallas as pl
from jax.experimental.pallas import tpu as pltpu


def _resblock_kernel(x_ref, w1_ref, g1_ref, b1_ref, w2_ref, g2_ref, b2_ref, out_ref):
    """Entire forward pass in one invocation (no grid).

    x_ref   : (N, C, L) f32, VMEM   -- PyTorch NCL layout, L on lanes
    w1_ref  : (C*C*3,)  f32, SMEM   -- conv1 weight, PyTorch (Cout, Cin, 3) row-major flat
    w2_ref  : (C*C*3,)  f32, SMEM   -- conv2 weight
    g*/b*   : (C,)      f32, SMEM   -- BN gamma / beta
    out_ref : (N, C, L) f32, VMEM
    """
    N, C, L = x_ref.shape
    eps = 1e-5
    inv_cnt = 1.0 / float(N * L)

    # Single dense load; per-channel 2D (N, L) slabs (lane-dense in L).
    x = x_ref[...]
    x_ch = [x[:, ci, :] for ci in range(C)]

    zcol = jnp.zeros((N, 1), jnp.float32)

    def taps(h):
        # (h[l-1], h[l], h[l+1]) with zero padding at the sequence ends, built as
        # shifted values in vregs (no padded scratch round trip).
        left = jnp.concatenate([zcol, h[:, : L - 1]], axis=1)    # tap k=0
        right = jnp.concatenate([h[:, 1:], zcol], axis=1)        # tap k=2
        return (left, h, right)

    def conv3(h_ch, w_ref):
        # VPU broadcast-FMA conv: C*C*3 scalar weights from SMEM.
        t = [taps(h) for h in h_ch]
        outs = []
        for co in range(C):
            acc = jnp.zeros((N, L), jnp.float32)
            for ci in range(C):
                for k in range(3):
                    acc = acc + w_ref[(co * C + ci) * 3 + k] * t[ci][k]
            outs.append(acc)
        return outs

    def bn(h_ch, g_ref, b_ref):
        # Training-mode BatchNorm1d: per-channel batch mean / biased variance,
        # two-pass (centered) variance for numerical robustness.
        outs = []
        for c in range(C):
            h = h_ch[c]
            mean = jnp.sum(h, keepdims=True) * inv_cnt                 # (1, 1)
            centered = h - mean
            var = jnp.sum(centered * centered, keepdims=True) * inv_cnt
            scale = g_ref[c] * lax.rsqrt(var + eps)                    # (1, 1)
            outs.append(centered * scale + b_ref[c])
        return outs

    # conv1 -> bn1 -> relu
    h1 = conv3(x_ch, w1_ref)
    h1 = [jnp.maximum(h, 0.0) for h in bn(h1, g1_ref, b1_ref)]

    # conv2 -> bn2
    h2 = conv3(h1, w2_ref)
    h2 = bn(h2, g2_ref, b2_ref)

    # identity residual add + final relu; one dense 3D store.
    out = jnp.stack([jnp.maximum(h2[c] + x_ch[c], 0.0) for c in range(C)], axis=1)
    out_ref[...] = out


def residual_block(x_ncl, W1, g1, b1, W2, g2, b2):
    """x_ncl: (N, C, L) float32 (PyTorch layout). Returns (N, C, L)."""
    N, C, L = x_ncl.shape
    Cout, Cin, K = W1.shape
    assert K == 3 and Cin == C and Cout == C, \
        "identity residual requires in_channels == out_channels, kernel_size=3"

    x = x_ncl.astype(jnp.float32)
    w1 = W1.astype(jnp.float32).reshape(-1)      # (C*C*3,) row-major == (co*C+ci)*3+k
    w2 = W2.astype(jnp.float32).reshape(-1)
    g1f, b1f = g1.astype(jnp.float32), b1.astype(jnp.float32)
    g2f, b2f = g2.astype(jnp.float32), b2.astype(jnp.float32)

    vmem_space = pltpu.MemorySpace.VMEM
    smem_space = pltpu.MemorySpace.SMEM

    out = pl.pallas_call(
        _resblock_kernel,
        out_shape=jax.ShapeDtypeStruct((N, C, L), jnp.float32),
        in_specs=[
            pl.BlockSpec(memory_space=vmem_space),   # x
            pl.BlockSpec(memory_space=smem_space),   # w1 (scalars)
            pl.BlockSpec(memory_space=smem_space),   # gamma1
            pl.BlockSpec(memory_space=smem_space),   # beta1
            pl.BlockSpec(memory_space=smem_space),   # w2
            pl.BlockSpec(memory_space=smem_space),   # gamma2
            pl.BlockSpec(memory_space=smem_space),   # beta2
        ],
        out_specs=pl.BlockSpec(memory_space=vmem_space),
        compiler_params=pltpu.CompilerParams(
            # Actual footprint is a few KiB; 4 MiB is generous headroom and fits
            # every generation's scoped-VMEM default (v5e 16 MiB, v7x 32 MiB).
            vmem_limit_bytes=4 * 1024 * 1024,
        ),
    )(x, w1, g1f, b1f, w2, g2f, b2f)
    return out


def _reference(x_ncl, W1, g1, b1, W2, g2, b2):
    """Pure-JAX reference of the PyTorch forward (training-mode BN)."""
    dn = lax.conv_dimension_numbers(x_ncl.shape, W1.shape, ('NCH', 'OIH', 'NCH'))

    def conv(h, W):
        return lax.conv_general_dilated(h, W, window_strides=(1,),
                                        padding=((1, 1),), dimension_numbers=dn)

    def bn(h, g, b):
        mean = h.mean(axis=(0, 2), keepdims=True)
        var = ((h - mean) ** 2).mean(axis=(0, 2), keepdims=True)
        return (h - mean) * lax.rsqrt(var + 1e-5) * g[None, :, None] + b[None, :, None]

    h = jax.nn.relu(bn(conv(x_ncl, W1), g1, b1))
    h = bn(conv(h, W2), g2, b2)
    return jax.nn.relu(h + x_ncl)


if __name__ == "__main__":
    N, C, L = 2, 4, 16                       # batch, channels (in == out), seq length
    key = jax.random.PRNGKey(0)
    kx, k1, k2, kg1, kb1, kg2, kb2 = jax.random.split(key, 7)

    x = jax.random.normal(kx, (N, C, L), jnp.float32)
    W1 = jax.random.normal(k1, (C, C, 3), jnp.float32) * 0.3     # Conv1d weight (Cout,Cin,3)
    W2 = jax.random.normal(k2, (C, C, 3), jnp.float32) * 0.3
    g1 = 1.0 + 0.1 * jax.random.normal(kg1, (C,), jnp.float32)   # BN gamma/beta
    b1 = 0.1 * jax.random.normal(kb1, (C,), jnp.float32)
    g2 = 1.0 + 0.1 * jax.random.normal(kg2, (C,), jnp.float32)
    b2 = 0.1 * jax.random.normal(kb2, (C,), jnp.float32)

    out = residual_block(x, W1, g1, b1, W2, g2, b2)
    out = jax.block_until_ready(out)

    ref = _reference(x, W1, g1, b1, W2, g2, b2)
    assert out.shape == (N, C, L)
    assert jnp.max(jnp.abs(out - ref)) < 1e-3, "mismatch vs pure-JAX reference"

    print("KERNEL_OK")
</pallas_src>

<mosaic_0001>
module attributes {stable_mosaic.version = 11 : i64} {
  func.func @_resblock_kernel(%arg0: memref<2x4x16xf32, #tpu.memory_space<vmem>>, %arg1: memref<48xf32, #tpu.memory_space<smem>>, %arg2: memref<4xf32, #tpu.memory_space<smem>>, %arg3: memref<4xf32, #tpu.memory_space<smem>>, %arg4: memref<48xf32, #tpu.memory_space<smem>>, %arg5: memref<4xf32, #tpu.memory_space<smem>>, %arg6: memref<4xf32, #tpu.memory_space<smem>>, %arg7: memref<2x4x16xf32, #tpu.memory_space<vmem>>) attributes {dimension_semantics = [], scalar_prefetch = 0 : i64, scratch_operands = 0 : i64, tpu.core_type = #tpu.core_type<tc>} {
    %c0 = arith.constant 0 : index
    %c0_0 = arith.constant 0 : index
    %c0_1 = arith.constant 0 : index
    %0 = vector.load %arg0[%c0, %c0_0, %c0_1] : memref<2x4x16xf32, #tpu.memory_space<vmem>>, vector<2x4x16xf32>
    %1 = vector.extract_strided_slice %0 {offsets = [0, 0, 0], sizes = [2, 1, 16], strides = [1, 1, 1]} : vector<2x4x16xf32> to vector<2x1x16xf32>
    %2 = vector.shape_cast %1 : vector<2x1x16xf32> to vector<2x16xf32>
    %3 = vector.extract_strided_slice %0 {offsets = [0, 1, 0], sizes = [2, 1, 16], strides = [1, 1, 1]} : vector<2x4x16xf32> to vector<2x1x16xf32>
    %4 = vector.shape_cast %3 : vector<2x1x16xf32> to vector<2x16xf32>
    %5 = vector.extract_strided_slice %0 {offsets = [0, 2, 0], sizes = [2, 1, 16], strides = [1, 1, 1]} : vector<2x4x16xf32> to vector<2x1x16xf32>
    %6 = vector.shape_cast %5 : vector<2x1x16xf32> to vector<2x16xf32>
    %7 = vector.extract_strided_slice %0 {offsets = [0, 3, 0], sizes = [2, 1, 16], strides = [1, 1, 1]} : vector<2x4x16xf32> to vector<2x1x16xf32>
    %8 = vector.shape_cast %7 : vector<2x1x16xf32> to vector<2x16xf32>
    %cst = arith.constant 0.000000e+00 : f32
    %9 = vector.broadcast %cst : f32 to vector<2x1xf32>
    %10 = vector.extract_strided_slice %2 {offsets = [0, 0], sizes = [2, 15], strides = [1, 1]} : vector<2x16xf32> to vector<2x15xf32>
    %11 = tpu.concatenate %9, %10 in 1 : vector<2x1xf32>, vector<2x15xf32> -> vector<2x16xf32>
    %12 = vector.extract_strided_slice %2 {offsets = [0, 1], sizes = [2, 15], strides = [1, 1]} : vector<2x16xf32> to vector<2x15xf32>
    %13 = tpu.concatenate %12, %9 in 1 : vector<2x15xf32>, vector<2x1xf32> -> vector<2x16xf32>
    %14 = vector.extract_strided_slice %4 {offsets = [0, 0], sizes = [2, 15], strides = [1, 1]} : vector<2x16xf32> to vector<2x15xf32>
    %15 = tpu.concatenate %9, %14 in 1 : vector<2x1xf32>, vector<2x15xf32> -> vector<2x16xf32>
    %16 = vector.extract_strided_slice %4 {offsets = [0, 1], sizes = [2, 15], strides = [1, 1]} : vector<2x16xf32> to vector<2x15xf32>
    %17 = tpu.concatenate %16, %9 in 1 : vector<2x15xf32>, vector<2x1xf32> -> vector<2x16xf32>
    %18 = vector.extract_strided_slice %6 {offsets = [0, 0], sizes = [2, 15], strides = [1, 1]} : vector<2x16xf32> to vector<2x15xf32>
    %19 = tpu.concatenate %9, %18 in 1 : vector<2x1xf32>, vector<2x15xf32> -> vector<2x16xf32>
    %20 = vector.extract_strided_slice %6 {offsets = [0, 1], sizes = [2, 15], strides = [1, 1]} : vector<2x16xf32> to vector<2x15xf32>
    %21 = tpu.concatenate %20, %9 in 1 : vector<2x15xf32>, vector<2x1xf32> -> vector<2x16xf32>
    %22 = vector.extract_strided_slice %8 {offsets = [0, 0], sizes = [2, 15], strides = [1, 1]} : vector<2x16xf32> to vector<2x15xf32>
    %23 = tpu.concatenate %9, %22 in 1 : vector<2x1xf32>, vector<2x15xf32> -> vector<2x16xf32>
    %24 = vector.extract_strided_slice %8 {offsets = [0, 1], sizes = [2, 15], strides = [1, 1]} : vector<2x16xf32> to vector<2x15xf32>
    %25 = tpu.concatenate %24, %9 in 1 : vector<2x15xf32>, vector<2x1xf32> -> vector<2x16xf32>
    %cst_2 = arith.constant 0.000000e+00 : f32
    %26 = vector.broadcast %cst_2 : f32 to vector<2x16xf32>
    %c0_3 = arith.constant 0 : index
    %27 = memref.load %arg1[%c0_3] : memref<48xf32, #tpu.memory_space<smem>>
    %28 = vector.broadcast %27 : f32 to vector<2x16xf32>
    %29 = arith.mulf %28, %11 : vector<2x16xf32>
    %30 = arith.addf %26, %29 : vector<2x16xf32>
    %c1 = arith.constant 1 : index
    %31 = memref.load %arg1[%c1] : memref<48xf32, #tpu.memory_space<smem>>
    %32 = vector.broadcast %31 : f32 to vector<2x16xf32>
    %33 = arith.mulf %32, %2 : vector<2x16xf32>
    %34 = arith.addf %30, %33 : vector<2x16xf32>
    %c2 = arith.constant 2 : index
    %35 = memref.load %arg1[%c2] : memref<48xf32, #tpu.memory_space<smem>>
    %36 = vector.broadcast %35 : f32 to vector<2x16xf32>
    %37 = arith.mulf %36, %13 : vector<2x16xf32>
    %38 = arith.addf %34, %37 : vector<2x16xf32>
    %c3 = arith.constant 3 : index
    %39 = memref.load %arg1[%c3] : memref<48xf32, #tpu.memory_space<smem>>
    %40 = vector.broadcast %39 : f32 to vector<2x16xf32>
    %41 = arith.mulf %40, %15 : vector<2x16xf32>
    %42 = arith.addf %38, %41 : vector<2x16xf32>
    %c4 = arith.constant 4 : index
    %43 = memref.load %arg1[%c4] : memref<48xf32, #tpu.memory_space<smem>>
    %44 = vector.broadcast %43 : f32 to vector<2x16xf32>
    %45 = arith.mulf %44, %4 : vector<2x16xf32>
    %46 = arith.addf %42, %45 : vector<2x16xf32>
    %c5 = arith.constant 5 : index
    %47 = memref.load %arg1[%c5] : memref<48xf32, #tpu.memory_space<smem>>
    %48 = vector.broadcast %47 : f32 to vector<2x16xf32>
    %49 = arith.mulf %48, %17 : vector<2x16xf32>
    %50 = arith.addf %46, %49 : vector<2x16xf32>
    %c6 = arith.constant 6 : index
    %51 = memref.load %arg1[%c6] : memref<48xf32, #tpu.memory_space<smem>>
    %52 = vector.broadcast %51 : f32 to vector<2x16xf32>
    %53 = arith.mulf %52, %19 : vector<2x16xf32>
    %54 = arith.addf %50, %53 : vector<2x16xf32>
    %c7 = arith.constant 7 : index
    %55 = memref.load %arg1[%c7] : memref<48xf32, #tpu.memory_space<smem>>
    %56 = vector.broadcast %55 : f32 to vector<2x16xf32>
    %57 = arith.mulf %56, %6 : vector<2x16xf32>
    %58 = arith.addf %54, %57 : vector<2x16xf32>
    %c8 = arith.constant 8 : index
    %59 = memref.load %arg1[%c8] : memref<48xf32, #tpu.memory_space<smem>>
    %60 = vector.broadcast %59 : f32 to vector<2x16xf32>
    %61 = arith.mulf %60, %21 : vector<2x16xf32>
    %62 = arith.addf %58, %61 : vector<2x16xf32>
    %c9 = arith.constant 9 : index
    %63 = memref.load %arg1[%c9] : memref<48xf32, #tpu.memory_space<smem>>
    %64 = vector.broadcast %63 : f32 to vector<2x16xf32>
    %65 = arith.mulf %64, %23 : vector<2x16xf32>
    %66 = arith.addf %62, %65 : vector<2x16xf32>
    %c10 = arith.constant 10 : index
    %67 = memref.load %arg1[%c10] : memref<48xf32, #tpu.memory_space<smem>>
    %68 = vector.broadcast %67 : f32 to vector<2x16xf32>
    %69 = arith.mulf %68, %8 : vector<2x16xf32>
    %70 = arith.addf %66, %69 : vector<2x16xf32>
    %c11 = arith.constant 11 : index
    %71 = memref.load %arg1[%c11] : memref<48xf32, #tpu.memory_space<smem>>
    %72 = vector.broadcast %71 : f32 to vector<2x16xf32>
    %73 = arith.mulf %72, %25 : vector<2x16xf32>
    %74 = arith.addf %70, %73 : vector<2x16xf32>
    %cst_4 = arith.constant 0.000000e+00 : f32
    %75 = vector.broadcast %cst_4 : f32 to vector<2x16xf32>
    %c12 = arith.constant 12 : index
    %76 = memref.load %arg1[%c12] : memref<48xf32, #tpu.memory_space<smem>>
    %77 = vector.broadcast %76 : f32 to vector<2x16xf32>
    %78 = arith.mulf %77, %11 : vector<2x16xf32>
    %79 = arith.addf %75, %78 : vector<2x16xf32>
    %c13 = arith.constant 13 : index
    %80 = memref.load %arg1[%c13] : memref<48xf32, #tpu.memory_space<smem>>
    %81 = vector.broadcast %80 : f32 to vector<2x16xf32>
    %82 = arith.mulf %81, %2 : vector<2x16xf32>
    %83 = arith.addf %79, %82 : vector<2x16xf32>
    %c14 = arith.constant 14 : index
    %84 = memref.load %arg1[%c14] : memref<48xf32, #tpu.memory_space<smem>>
    %85 = vector.broadcast %84 : f32 to vector<2x16xf32>
    %86 = arith.mulf %85, %13 : vector<2x16xf32>
    %87 = arith.addf %83, %86 : vector<2x16xf32>
    %c15 = arith.constant 15 : index
    %88 = memref.load %arg1[%c15] : memref<48xf32, #tpu.memory_space<smem>>
    %89 = vector.broadcast %88 : f32 to vector<2x16xf32>
    %90 = arith.mulf %89, %15 : vector<2x16xf32>
    %91 = arith.addf %87, %90 : vector<2x16xf32>
    %c16 = arith.constant 16 : index
    %92 = memref.load %arg1[%c16] : memref<48xf32, #tpu.memory_space<smem>>
    %93 = vector.broadcast %92 : f32 to vector<2x16xf32>
    %94 = arith.mulf %93, %4 : vector<2x16xf32>
    %95 = arith.addf %91, %94 : vector<2x16xf32>
    %c17 = arith.constant 17 : index
    %96 = memref.load %arg1[%c17] : memref<48xf32, #tpu.memory_space<smem>>
    %97 = vector.broadcast %96 : f32 to vector<2x16xf32>
    %98 = arith.mulf %97, %17 : vector<2x16xf32>
    %99 = arith.addf %95, %98 : vector<2x16xf32>
    %c18 = arith.constant 18 : index
    %100 = memref.load %arg1[%c18] : memref<48xf32, #tpu.memory_space<smem>>
    %101 = vector.broadcast %100 : f32 to vector<2x16xf32>
    %102 = arith.mulf %101, %19 : vector<2x16xf32>
    %103 = arith.addf %99, %102 : vector<2x16xf32>
    %c19 = arith.constant 19 : index
    %104 = memref.load %arg1[%c19] : memref<48xf32, #tpu.memory_space<smem>>
    %105 = vector.broadcast %104 : f32 to vector<2x16xf32>
    %106 = arith.mulf %105, %6 : vector<2x16xf32>
    %107 = arith.addf %103, %106 : vector<2x16xf32>
    %c20 = arith.constant 20 : index
    %108 = memref.load %arg1[%c20] : memref<48xf32, #tpu.memory_space<smem>>
    %109 = vector.broadcast %108 : f32 to vector<2x16xf32>
    %110 = arith.mulf %109, %21 : vector<2x16xf32>
    %111 = arith.addf %107, %110 : vector<2x16xf32>
    %c21 = arith.constant 21 : index
    %112 = memref.load %arg1[%c21] : memref<48xf32, #tpu.memory_space<smem>>
    %113 = vector.broadcast %112 : f32 to vector<2x16xf32>
    %114 = arith.mulf %113, %23 : vector<2x16xf32>
    %115 = arith.addf %111, %114 : vector<2x16xf32>
    %c22 = arith.constant 22 : index
    %116 = memref.load %arg1[%c22] : memref<48xf32, #tpu.memory_space<smem>>
    %117 = vector.broadcast %116 : f32 to vector<2x16xf32>
    %118 = arith.mulf %117, %8 : vector<2x16xf32>
    %119 = arith.addf %115, %118 : vector<2x16xf32>
    %c23 = arith.constant 23 : index
    %120 = memref.load %arg1[%c23] : memref<48xf32, #tpu.memory_space<smem>>
    %121 = vector.broadcast %120 : f32 to vector<2x16xf32>
    %122 = arith.mulf %121, %25 : vector<2x16xf32>
    %123 = arith.addf %119, %122 : vector<2x16xf32>
    %cst_5 = arith.constant 0.000000e+00 : f32
    %124 = vector.broadcast %cst_5 : f32 to vector<2x16xf32>
    %c24 = arith.constant 24 : index
    %125 = memref.load %arg1[%c24] : memref<48xf32, #tpu.memory_space<smem>>
    %126 = vector.broadcast %125 : f32 to vector<2x16xf32>
    %127 = arith.mulf %126, %11 : vector<2x16xf32>
    %128 = arith.addf %124, %127 : vector<2x16xf32>
    %c25 = arith.constant 25 : index
    %129 = memref.load %arg1[%c25] : memref<48xf32, #tpu.memory_space<smem>>
    %130 = vector.broadcast %129 : f32 to vector<2x16xf32>
    %131 = arith.mulf %130, %2 : vector<2x16xf32>
    %132 = arith.addf %128, %131 : vector<2x16xf32>
    %c26 = arith.constant 26 : index
    %133 = memref.load %arg1[%c26] : memref<48xf32, #tpu.memory_space<smem>>
    %134 = vector.broadcast %133 : f32 to vector<2x16xf32>
    %135 = arith.mulf %134, %13 : vector<2x16xf32>
    %136 = arith.addf %132, %135 : vector<2x16xf32>
    %c27 = arith.constant 27 : index
    %137 = memref.load %arg1[%c27] : memref<48xf32, #tpu.memory_space<smem>>
    %138 = vector.broadcast %137 : f32 to vector<2x16xf32>
    %139 = arith.mulf %138, %15 : vector<2x16xf32>
    %140 = arith.addf %136, %139 : vector<2x16xf32>
    %c28 = arith.constant 28 : index
    %141 = memref.load %arg1[%c28] : memref<48xf32, #tpu.memory_space<smem>>
    %142 = vector.broadcast %141 : f32 to vector<2x16xf32>
    %143 = arith.mulf %142, %4 : vector<2x16xf32>
    %144 = arith.addf %140, %143 : vector<2x16xf32>
    %c29 = arith.constant 29 : index
    %145 = memref.load %arg1[%c29] : memref<48xf32, #tpu.memory_space<smem>>
    %146 = vector.broadcast %145 : f32 to vector<2x16xf32>
    %147 = arith.mulf %146, %17 : vector<2x16xf32>
    %148 = arith.addf %144, %147 : vector<2x16xf32>
    %c30 = arith.constant 30 : index
    %149 = memref.load %arg1[%c30] : memref<48xf32, #tpu.memory_space<smem>>
    %150 = vector.broadcast %149 : f32 to vector<2x16xf32>
    %151 = arith.mulf %150, %19 : vector<2x16xf32>
    %152 = arith.addf %148, %151 : vector<2x16xf32>
    %c31 = arith.constant 31 : index
    %153 = memref.load %arg1[%c31] : memref<48xf32, #tpu.memory_space<smem>>
    %154 = vector.broadcast %153 : f32 to vector<2x16xf32>
    %155 = arith.mulf %154, %6 : vector<2x16xf32>
    %156 = arith.addf %152, %155 : vector<2x16xf32>
    %c32 = arith.constant 32 : index
    %157 = memref.load %arg1[%c32] : memref<48xf32, #tpu.memory_space<smem>>
    %158 = vector.broadcast %157 : f32 to vector<2x16xf32>
    %159 = arith.mulf %158, %21 : vector<2x16xf32>
    %160 = arith.addf %156, %159 : vector<2x16xf32>
    %c33 = arith.constant 33 : index
    %161 = memref.load %arg1[%c33] : memref<48xf32, #tpu.memory_space<smem>>
    %162 = vector.broadcast %161 : f32 to vector<2x16xf32>
    %163 = arith.mulf %162, %23 : vector<2x16xf32>
    %164 = arith.addf %160, %163 : vector<2x16xf32>
    %c34 = arith.constant 34 : index
    %165 = memref.load %arg1[%c34] : memref<48xf32, #tpu.memory_space<smem>>
    %166 = vector.broadcast %165 : f32 to vector<2x16xf32>
    %167 = arith.mulf %166, %8 : vector<2x16xf32>
    %168 = arith.addf %164, %167 : vector<2x16xf32>
    %c35 = arith.constant 35 : index
    %169 = memref.load %arg1[%c35] : memref<48xf32, #tpu.memory_space<smem>>
    %170 = vector.broadcast %169 : f32 to vector<2x16xf32>
    %171 = arith.mulf %170, %25 : vector<2x16xf32>
    %172 = arith.addf %168, %171 : vector<2x16xf32>
    %cst_6 = arith.constant 0.000000e+00 : f32
    %173 = vector.broadcast %cst_6 : f32 to vector<2x16xf32>
    %c36 = arith.constant 36 : index
    %174 = memref.load %arg1[%c36] : memref<48xf32, #tpu.memory_space<smem>>
    %175 = vector.broadcast %174 : f32 to vector<2x16xf32>
    %176 = arith.mulf %175, %11 : vector<2x16xf32>
    %177 = arith.addf %173, %176 : vector<2x16xf32>
    %c37 = arith.constant 37 : index
    %178 = memref.load %arg1[%c37] : memref<48xf32, #tpu.memory_space<smem>>
    %179 = vector.broadcast %178 : f32 to vector<2x16xf32>
    %180 = arith.mulf %179, %2 : vector<2x16xf32>
    %181 = arith.addf %177, %180 : vector<2x16xf32>
    %c38 = arith.constant 38 : index
    %182 = memref.load %arg1[%c38] : memref<48xf32, #tpu.memory_space<smem>>
    %183 = vector.broadcast %182 : f32 to vector<2x16xf32>
    %184 = arith.mulf %183, %13 : vector<2x16xf32>
    %185 = arith.addf %181, %184 : vector<2x16xf32>
    %c39 = arith.constant 39 : index
    %186 = memref.load %arg1[%c39] : memref<48xf32, #tpu.memory_space<smem>>
    %187 = vector.broadcast %186 : f32 to vector<2x16xf32>
    %188 = arith.mulf %187, %15 : vector<2x16xf32>
    %189 = arith.addf %185, %188 : vector<2x16xf32>
    %c40 = arith.constant 40 : index
    %190 = memref.load %arg1[%c40] : memref<48xf32, #tpu.memory_space<smem>>
    %191 = vector.broadcast %190 : f32 to vector<2x16xf32>
    %192 = arith.mulf %191, %4 : vector<2x16xf32>
    %193 = arith.addf %189, %192 : vector<2x16xf32>
    %c41 = arith.constant 41 : index
    %194 = memref.load %arg1[%c41] : memref<48xf32, #tpu.memory_space<smem>>
    %195 = vector.broadcast %194 : f32 to vector<2x16xf32>
    %196 = arith.mulf %195, %17 : vector<2x16xf32>
    %197 = arith.addf %193, %196 : vector<2x16xf32>
    %c42 = arith.constant 42 : index
    %198 = memref.load %arg1[%c42] : memref<48xf32, #tpu.memory_space<smem>>
    %199 = vector.broadcast %198 : f32 to vector<2x16xf32>
    %200 = arith.mulf %199, %19 : vector<2x16xf32>
    %201 = arith.addf %197, %200 : vector<2x16xf32>
    %c43 = arith.constant 43 : index
    %202 = memref.load %arg1[%c43] : memref<48xf32, #tpu.memory_space<smem>>
    %203 = vector.broadcast %202 : f32 to vector<2x16xf32>
    %204 = arith.mulf %203, %6 : vector<2x16xf32>
    %205 = arith.addf %201, %204 : vector<2x16xf32>
    %c44 = arith.constant 44 : index
    %206 = memref.load %arg1[%c44] : memref<48xf32, #tpu.memory_space<smem>>
    %207 = vector.broadcast %206 : f32 to vector<2x16xf32>
    %208 = arith.mulf %207, %21 : vector<2x16xf32>
    %209 = arith.addf %205, %208 : vector<2x16xf32>
    %c45 = arith.constant 45 : index
    %210 = memref.load %arg1[%c45] : memref<48xf32, #tpu.memory_space<smem>>
    %211 = vector.broadcast %210 : f32 to vector<2x16xf32>
    %212 = arith.mulf %211, %23 : vector<2x16xf32>
    %213 = arith.addf %209, %212 : vector<2x16xf32>
    %c46 = arith.constant 46 : index
    %214 = memref.load %arg1[%c46] : memref<48xf32, #tpu.memory_space<smem>>
    %215 = vector.broadcast %214 : f32 to vector<2x16xf32>
    %216 = arith.mulf %215, %8 : vector<2x16xf32>
    %217 = arith.addf %213, %216 : vector<2x16xf32>
    %c47 = arith.constant 47 : index
    %218 = memref.load %arg1[%c47] : memref<48xf32, #tpu.memory_space<smem>>
    %219 = vector.broadcast %218 : f32 to vector<2x16xf32>
    %220 = arith.mulf %219, %25 : vector<2x16xf32>
    %221 = arith.addf %217, %220 : vector<2x16xf32>
    %222 = vector.shape_cast %74 : vector<2x16xf32> to vector<1x2x16xf32>
    %cst_7 = arith.constant dense<0.000000e+00> : vector<1xf32>
    %223 = vector.multi_reduction <add>, %222, %cst_7 [1, 2] : vector<1x2x16xf32> to vector<1xf32>
    %224 = vector.shape_cast %223 : vector<1xf32> to vector<1x1x1xf32>
    %225 = vector.extract %224[0, 0, 0] : f32 from vector<1x1x1xf32>
    %226 = vector.broadcast %225 : f32 to vector<1x1xf32>
    %cst_8 = arith.constant 3.125000e-02 : f32
    %227 = vector.broadcast %cst_8 : f32 to vector<1x1xf32>
    %228 = arith.mulf %226, %227 : vector<1x1xf32>
    %229 = vector.broadcast %228 : vector<1x1xf32> to vector<2x16xf32>
    %230 = arith.subf %74, %229 : vector<2x16xf32>
    %231 = arith.mulf %230, %230 : vector<2x16xf32>
    %232 = vector.shape_cast %231 : vector<2x16xf32> to vector<1x2x16xf32>
    %cst_9 = arith.constant dense<0.000000e+00> : vector<1xf32>
    %233 = vector.multi_reduction <add>, %232, %cst_9 [1, 2] : vector<1x2x16xf32> to vector<1xf32>
    %234 = vector.shape_cast %233 : vector<1xf32> to vector<1x1x1xf32>
    %235 = vector.extract %234[0, 0, 0] : f32 from vector<1x1x1xf32>
    %236 = vector.broadcast %235 : f32 to vector<1x1xf32>
    %cst_10 = arith.constant 3.125000e-02 : f32
    %237 = vector.broadcast %cst_10 : f32 to vector<1x1xf32>
    %238 = arith.mulf %236, %237 : vector<1x1xf32>
    %c0_11 = arith.constant 0 : index
    %239 = memref.load %arg2[%c0_11] : memref<4xf32, #tpu.memory_space<smem>>
    %cst_12 = arith.constant 9.99999974E-6 : f32
    %240 = vector.broadcast %cst_12 : f32 to vector<1x1xf32>
    %241 = arith.addf %238, %240 : vector<1x1xf32>
    %242 = math.rsqrt %241 : vector<1x1xf32>
    %243 = vector.broadcast %239 : f32 to vector<1x1xf32>
    %244 = arith.mulf %243, %242 : vector<1x1xf32>
    %245 = vector.broadcast %244 : vector<1x1xf32> to vector<2x16xf32>
    %246 = arith.mulf %230, %245 : vector<2x16xf32>
    %c0_13 = arith.constant 0 : index
    %247 = memref.load %arg3[%c0_13] : memref<4xf32, #tpu.memory_space<smem>>
    %248 = vector.broadcast %247 : f32 to vector<2x16xf32>
    %249 = arith.addf %246, %248 : vector<2x16xf32>
    %250 = vector.shape_cast %123 : vector<2x16xf32> to vector<1x2x16xf32>
    %cst_14 = arith.constant dense<0.000000e+00> : vector<1xf32>
    %251 = vector.multi_reduction <add>, %250, %cst_14 [1, 2] : vector<1x2x16xf32> to vector<1xf32>
    %252 = vector.shape_cast %251 : vector<1xf32> to vector<1x1x1xf32>
    %253 = vector.extract %252[0, 0, 0] : f32 from vector<1x1x1xf32>
    %254 = vector.broadcast %253 : f32 to vector<1x1xf32>
    %cst_15 = arith.constant 3.125000e-02 : f32
    %255 = vector.broadcast %cst_15 : f32 to vector<1x1xf32>
    %256 = arith.mulf %254, %255 : vector<1x1xf32>
    %257 = vector.broadcast %256 : vector<1x1xf32> to vector<2x16xf32>
    %258 = arith.subf %123, %257 : vector<2x16xf32>
    %259 = arith.mulf %258, %258 : vector<2x16xf32>
    %260 = vector.shape_cast %259 : vector<2x16xf32> to vector<1x2x16xf32>
    %cst_16 = arith.constant dense<0.000000e+00> : vector<1xf32>
    %261 = vector.multi_reduction <add>, %260, %cst_16 [1, 2] : vector<1x2x16xf32> to vector<1xf32>
    %262 = vector.shape_cast %261 : vector<1xf32> to vector<1x1x1xf32>
    %263 = vector.extract %262[0, 0, 0] : f32 from vector<1x1x1xf32>
    %264 = vector.broadcast %263 : f32 to vector<1x1xf32>
    %cst_17 = arith.constant 3.125000e-02 : f32
    %265 = vector.broadcast %cst_17 : f32 to vector<1x1xf32>
    %266 = arith.mulf %264, %265 : vector<1x1xf32>
    %c1_18 = arith.constant 1 : index
    %267 = memref.load %arg2[%c1_18] : memref<4xf32, #tpu.memory_space<smem>>
    %cst_19 = arith.constant 9.99999974E-6 : f32
    %268 = vector.broadcast %cst_19 : f32 to vector<1x1xf32>
    %269 = arith.addf %266, %268 : vector<1x1xf32>
    %270 = math.rsqrt %269 : vector<1x1xf32>
    %271 = vector.broadcast %267 : f32 to vector<1x1xf32>
    %272 = arith.mulf %271, %270 : vector<1x1xf32>
    %273 = vector.broadcast %272 : vector<1x1xf32> to vector<2x16xf32>
    %274 = arith.mulf %258, %273 : vector<2x16xf32>
    %c1_20 = arith.constant 1 : index
    %275 = memref.load %arg3[%c1_20] : memref<4xf32, #tpu.memory_space<smem>>
    %276 = vector.broadcast %275 : f32 to vector<2x16xf32>
    %277 = arith.addf %274, %276 : vector<2x16xf32>
    %278 = vector.shape_cast %172 : vector<2x16xf32> to vector<1x2x16xf32>
    %cst_21 = arith.constant dense<0.000000e+00> : vector<1xf32>
    %279 = vector.multi_reduction <add>, %278, %cst_21 [1, 2] : vector<1x2x16xf32> to vector<1xf32>
    %280 = vector.shape_cast %279 : vector<1xf32> to vector<1x1x1xf32>
    %281 = vector.extract %280[0, 0, 0] : f32 from vector<1x1x1xf32>
    %282 = vector.broadcast %281 : f32 to vector<1x1xf32>
    %cst_22 = arith.constant 3.125000e-02 : f32
    %283 = vector.broadcast %cst_22 : f32 to vector<1x1xf32>
    %284 = arith.mulf %282, %283 : vector<1x1xf32>
    %285 = vector.broadcast %284 : vector<1x1xf32> to vector<2x16xf32>
    %286 = arith.subf %172, %285 : vector<2x16xf32>
    %287 = arith.mulf %286, %286 : vector<2x16xf32>
    %288 = vector.shape_cast %287 : vector<2x16xf32> to vector<1x2x16xf32>
    %cst_23 = arith.constant dense<0.000000e+00> : vector<1xf32>
    %289 = vector.multi_reduction <add>, %288, %cst_23 [1, 2] : vector<1x2x16xf32> to vector<1xf32>
    %290 = vector.shape_cast %289 : vector<1xf32> to vector<1x1x1xf32>
    %291 = vector.extract %290[0, 0, 0] : f32 from vector<1x1x1xf32>
    %292 = vector.broadcast %291 : f32 to vector<1x1xf32>
    %cst_24 = arith.constant 3.125000e-02 : f32
    %293 = vector.broadcast %cst_24 : f32 to vector<1x1xf32>
    %294 = arith.mulf %292, %293 : vector<1x1xf32>
    %c2_25 = arith.constant 2 : index
    %295 = memref.load %arg2[%c2_25] : memref<4xf32, #tpu.memory_space<smem>>
    %cst_26 = arith.constant 9.99999974E-6 : f32
    %296 = vector.broadcast %cst_26 : f32 to vector<1x1xf32>
    %297 = arith.addf %294, %296 : vector<1x1xf32>
    %298 = math.rsqrt %297 : vector<1x1xf32>
    %299 = vector.broadcast %295 : f32 to vector<1x1xf32>
    %300 = arith.mulf %299, %298 : vector<1x1xf32>
    %301 = vector.broadcast %300 : vector<1x1xf32> to vector<2x16xf32>
    %302 = arith.mulf %286, %301 : vector<2x16xf32>
    %c2_27 = arith.constant 2 : index
    %303 = memref.load %arg3[%c2_27] : memref<4xf32, #tpu.memory_space<smem>>
    %304 = vector.broadcast %303 : f32 to vector<2x16xf32>
    %305 = arith.addf %302, %304 : vector<2x16xf32>
    %306 = vector.shape_cast %221 : vector<2x16xf32> to vector<1x2x16xf32>
    %cst_28 = arith.constant dense<0.000000e+00> : vector<1xf32>
    %307 = vector.multi_reduction <add>, %306, %cst_28 [1, 2] : vector<1x2x16xf32> to vector<1xf32>
    %308 = vector.shape_cast %307 : vector<1xf32> to vector<1x1x1xf32>
    %309 = vector.extract %308[0, 0, 0] : f32 from vector<1x1x1xf32>
    %310 = vector.broadcast %309 : f32 to vector<1x1xf32>
    %cst_29 = arith.constant 3.125000e-02 : f32
    %311 = vector.broadcast %cst_29 : f32 to vector<1x1xf32>
    %312 = arith.mulf %310, %311 : vector<1x1xf32>
    %313 = vector.broadcast %312 : vector<1x1xf32> to vector<2x16xf32>
    %314 = arith.subf %221, %313 : vector<2x16xf32>
    %315 = arith.mulf %314, %314 : vector<2x16xf32>
    %316 = vector.shape_cast %315 : vector<2x16xf32> to vector<1x2x16xf32>
    %cst_30 = arith.constant dense<0.000000e+00> : vector<1xf32>
    %317 = vector.multi_reduction <add>, %316, %cst_30 [1, 2] : vector<1x2x16xf32> to vector<1xf32>
    %318 = vector.shape_cast %317 : vector<1xf32> to vector<1x1x1xf32>
    %319 = vector.extract %318[0, 0, 0] : f32 from vector<1x1x1xf32>
    %320 = vector.broadcast %319 : f32 to vector<1x1xf32>
    %cst_31 = arith.constant 3.125000e-02 : f32
    %321 = vector.broadcast %cst_31 : f32 to vector<1x1xf32>
    %322 = arith.mulf %320, %321 : vector<1x1xf32>
    %c3_32 = arith.constant 3 : index
    %323 = memref.load %arg2[%c3_32] : memref<4xf32, #tpu.memory_space<smem>>
    %cst_33 = arith.constant 9.99999974E-6 : f32
    %324 = vector.broadcast %cst_33 : f32 to vector<1x1xf32>
    %325 = arith.addf %322, %324 : vector<1x1xf32>
    %326 = math.rsqrt %325 : vector<1x1xf32>
    %327 = vector.broadcast %323 : f32 to vector<1x1xf32>
    %328 = arith.mulf %327, %326 : vector<1x1xf32>
    %329 = vector.broadcast %328 : vector<1x1xf32> to vector<2x16xf32>
    %330 = arith.mulf %314, %329 : vector<2x16xf32>
    %c3_34 = arith.constant 3 : index
    %331 = memref.load %arg3[%c3_34] : memref<4xf32, #tpu.memory_space<smem>>
    %332 = vector.broadcast %331 : f32 to vector<2x16xf32>
    %333 = arith.addf %330, %332 : vector<2x16xf32>
    %cst_35 = arith.constant 0.000000e+00 : f32
    %334 = vector.broadcast %cst_35 : f32 to vector<2x16xf32>
    %335 = arith.maximumf %249, %334 : vector<2x16xf32>
    %cst_36 = arith.constant 0.000000e+00 : f32
    %336 = vector.broadcast %cst_36 : f32 to vector<2x16xf32>
    %337 = arith.maximumf %277, %336 : vector<2x16xf32>
    %cst_37 = arith.constant 0.000000e+00 : f32
    %338 = vector.broadcast %cst_37 : f32 to vector<2x16xf32>
    %339 = arith.maximumf %305, %338 : vector<2x16xf32>
    %cst_38 = arith.constant 0.000000e+00 : f32
    %340 = vector.broadcast %cst_38 : f32 to vector<2x16xf32>
    %341 = arith.maximumf %333, %340 : vector<2x16xf32>
    %342 = vector.extract_strided_slice %335 {offsets = [0, 0], sizes = [2, 15], strides = [1, 1]} : vector<2x16xf32> to vector<2x15xf32>
    %343 = tpu.concatenate %9, %342 in 1 : vector<2x1xf32>, vector<2x15xf32> -> vector<2x16xf32>
    %344 = vector.extract_strided_slice %335 {offsets = [0, 1], sizes = [2, 15], strides = [1, 1]} : vector<2x16xf32> to vector<2x15xf32>
    %345 = tpu.concatenate %344, %9 in 1 : vector<2x15xf32>, vector<2x1xf32> -> vector<2x16xf32>
    %346 = vector.extract_strided_slice %337 {offsets = [0, 0], sizes = [2, 15], strides = [1, 1]} : vector<2x16xf32> to vector<2x15xf32>
    %347 = tpu.concatenate %9, %346 in 1 : vector<2x1xf32>, vector<2x15xf32> -> vector<2x16xf32>
    %348 = vector.extract_strided_slice %337 {offsets = [0, 1], sizes = [2, 15], strides = [1, 1]} : vector<2x16xf32> to vector<2x15xf32>
    %349 = tpu.concatenate %348, %9 in 1 : vector<2x15xf32>, vector<2x1xf32> -> vector<2x16xf32>
    %350 = vector.extract_strided_slice %339 {offsets = [0, 0], sizes = [2, 15], strides = [1, 1]} : vector<2x16xf32> to vector<2x15xf32>
    %351 = tpu.concatenate %9, %350 in 1 : vector<2x1xf32>, vector<2x15xf32> -> vector<2x16xf32>
    %352 = vector.extract_strided_slice %339 {offsets = [0, 1], sizes = [2, 15], strides = [1, 1]} : vector<2x16xf32> to vector<2x15xf32>
    %353 = tpu.concatenate %352, %9 in 1 : vector<2x15xf32>, vector<2x1xf32> -> vector<2x16xf32>
    %354 = vector.extract_strided_slice %341 {offsets = [0, 0], sizes = [2, 15], strides = [1, 1]} : vector<2x16xf32> to vector<2x15xf32>
    %355 = tpu.concatenate %9, %354 in 1 : vector<2x1xf32>, vector<2x15xf32> -> vector<2x16xf32>
    %356 = vector.extract_strided_slice %341 {offsets = [0, 1], sizes = [2, 15], strides = [1, 1]} : vector<2x16xf32> to vector<2x15xf32>
    %357 = tpu.concatenate %356, %9 in 1 : vector<2x15xf32>, vector<2x1xf32> -> vector<2x16xf32>
    %cst_39 = arith.constant 0.000000e+00 : f32
    %358 = vector.broadcast %cst_39 : f32 to vector<2x16xf32>
    %c0_40 = arith.constant 0 : index
    %359 = memref.load %arg4[%c0_40] : memref<48xf32, #tpu.memory_space<smem>>
    %360 = vector.broadcast %359 : f32 to vector<2x16xf32>
    %361 = arith.mulf %360, %343 : vector<2x16xf32>
    %362 = arith.addf %358, %361 : vector<2x16xf32>
    %c1_41 = arith.constant 1 : index
    %363 = memref.load %arg4[%c1_41] : memref<48xf32, #tpu.memory_space<smem>>
    %364 = vector.broadcast %363 : f32 to vector<2x16xf32>
    %365 = arith.mulf %364, %335 : vector<2x16xf32>
    %366 = arith.addf %362, %365 : vector<2x16xf32>
    %c2_42 = arith.constant 2 : index
    %367 = memref.load %arg4[%c2_42] : memref<48xf32, #tpu.memory_space<smem>>
    %368 = vector.broadcast %367 : f32 to vector<2x16xf32>
    %369 = arith.mulf %368, %345 : vector<2x16xf32>
    %370 = arith.addf %366, %369 : vector<2x16xf32>
    %c3_43 = arith.constant 3 : index
    %371 = memref.load %arg4[%c3_43] : memref<48xf32, #tpu.memory_space<smem>>
    %372 = vector.broadcast %371 : f32 to vector<2x16xf32>
    %373 = arith.mulf %372, %347 : vector<2x16xf32>
    %374 = arith.addf %370, %373 : vector<2x16xf32>
    %c4_44 = arith.constant 4 : index
    %375 = memref.load %arg4[%c4_44] : memref<48xf32, #tpu.memory_space<smem>>
    %376 = vector.broadcast %375 : f32 to vector<2x16xf32>
    %377 = arith.mulf %376, %337 : vector<2x16xf32>
    %378 = arith.addf %374, %377 : vector<2x16xf32>
    %c5_45 = arith.constant 5 : index
    %379 = memref.load %arg4[%c5_45] : memref<48xf32, #tpu.memory_space<smem>>
    %380 = vector.broadcast %379 : f32 to vector<2x16xf32>
    %381 = arith.mulf %380, %349 : vector<2x16xf32>
    %382 = arith.addf %378, %381 : vector<2x16xf32>
    %c6_46 = arith.constant 6 : index
    %383 = memref.load %arg4[%c6_46] : memref<48xf32, #tpu.memory_space<smem>>
    %384 = vector.broadcast %383 : f32 to vector<2x16xf32>
    %385 = arith.mulf %384, %351 : vector<2x16xf32>
    %386 = arith.addf %382, %385 : vector<2x16xf32>
    %c7_47 = arith.constant 7 : index
    %387 = memref.load %arg4[%c7_47] : memref<48xf32, #tpu.memory_space<smem>>
    %388 = vector.broadcast %387 : f32 to vector<2x16xf32>
    %389 = arith.mulf %388, %339 : vector<2x16xf32>
    %390 = arith.addf %386, %389 : vector<2x16xf32>
    %c8_48 = arith.constant 8 : index
    %391 = memref.load %arg4[%c8_48] : memref<48xf32, #tpu.memory_space<smem>>
    %392 = vector.broadcast %391 : f32 to vector<2x16xf32>
    %393 = arith.mulf %392, %353 : vector<2x16xf32>
    %394 = arith.addf %390, %393 : vector<2x16xf32>
    %c9_49 = arith.constant 9 : index
    %395 = memref.load %arg4[%c9_49] : memref<48xf32, #tpu.memory_space<smem>>
    %396 = vector.broadcast %395 : f32 to vector<2x16xf32>
    %397 = arith.mulf %396, %355 : vector<2x16xf32>
    %398 = arith.addf %394, %397 : vector<2x16xf32>
    %c10_50 = arith.constant 10 : index
    %399 = memref.load %arg4[%c10_50] : memref<48xf32, #tpu.memory_space<smem>>
    %400 = vector.broadcast %399 : f32 to vector<2x16xf32>
    %401 = arith.mulf %400, %341 : vector<2x16xf32>
    %402 = arith.addf %398, %401 : vector<2x16xf32>
    %c11_51 = arith.constant 11 : index
    %403 = memref.load %arg4[%c11_51] : memref<48xf32, #tpu.memory_space<smem>>
    %404 = vector.broadcast %403 : f32 to vector<2x16xf32>
    %405 = arith.mulf %404, %357 : vector<2x16xf32>
    %406 = arith.addf %402, %405 : vector<2x16xf32>
    %cst_52 = arith.constant 0.000000e+00 : f32
    %407 = vector.broadcast %cst_52 : f32 to vector<2x16xf32>
    %c12_53 = arith.constant 12 : index
    %408 = memref.load %arg4[%c12_53] : memref<48xf32, #tpu.memory_space<smem>>
    %409 = vector.broadcast %408 : f32 to vector<2x16xf32>
    %410 = arith.mulf %409, %343 : vector<2x16xf32>
    %411 = arith.addf %407, %410 : vector<2x16xf32>
    %c13_54 = arith.constant 13 : index
    %412 = memref.load %arg4[%c13_54] : memref<48xf32, #tpu.memory_space<smem>>
    %413 = vector.broadcast %412 : f32 to vector<2x16xf32>
    %414 = arith.mulf %413, %335 : vector<2x16xf32>
    %415 = arith.addf %411, %414 : vector<2x16xf32>
    %c14_55 = arith.constant 14 : index
    %416 = memref.load %arg4[%c14_55] : memref<48xf32, #tpu.memory_space<smem>>
    %417 = vector.broadcast %416 : f32 to vector<2x16xf32>
    %418 = arith.mulf %417, %345 : vector<2x16xf32>
    %419 = arith.addf %415, %418 : vector<2x16xf32>
    %c15_56 = arith.constant 15 : index
    %420 = memref.load %arg4[%c15_56] : memref<48xf32, #tpu.memory_space<smem>>
    %421 = vector.broadcast %420 : f32 to vector<2x16xf32>
    %422 = arith.mulf %421, %347 : vector<2x16xf32>
    %423 = arith.addf %419, %422 : vector<2x16xf32>
    %c16_57 = arith.constant 16 : index
    %424 = memref.load %arg4[%c16_57] : memref<48xf32, #tpu.memory_space<smem>>
    %425 = vector.broadcast %424 : f32 to vector<2x16xf32>
    %426 = arith.mulf %425, %337 : vector<2x16xf32>
    %427 = arith.addf %423, %426 : vector<2x16xf32>
    %c17_58 = arith.constant 17 : index
    %428 = memref.load %arg4[%c17_58] : memref<48xf32, #tpu.memory_space<smem>>
    %429 = vector.broadcast %428 : f32 to vector<2x16xf32>
    %430 = arith.mulf %429, %349 : vector<2x16xf32>
    %431 = arith.addf %427, %430 : vector<2x16xf32>
    %c18_59 = arith.constant 18 : index
    %432 = memref.load %arg4[%c18_59] : memref<48xf32, #tpu.memory_space<smem>>
    %433 = vector.broadcast %432 : f32 to vector<2x16xf32>
    %434 = arith.mulf %433, %351 : vector<2x16xf32>
    %435 = arith.addf %431, %434 : vector<2x16xf32>
    %c19_60 = arith.constant 19 : index
    %436 = memref.load %arg4[%c19_60] : memref<48xf32, #tpu.memory_space<smem>>
    %437 = vector.broadcast %436 : f32 to vector<2x16xf32>
    %438 = arith.mulf %437, %339 : vector<2x16xf32>
    %439 = arith.addf %435, %438 : vector<2x16xf32>
    %c20_61 = arith.constant 20 : index
    %440 = memref.load %arg4[%c20_61] : memref<48xf32, #tpu.memory_space<smem>>
    %441 = vector.broadcast %440 : f32 to vector<2x16xf32>
    %442 = arith.mulf %441, %353 : vector<2x16xf32>
    %443 = arith.addf %439, %442 : vector<2x16xf32>
    %c21_62 = arith.constant 21 : index
    %444 = memref.load %arg4[%c21_62] : memref<48xf32, #tpu.memory_space<smem>>
    %445 = vector.broadcast %444 : f32 to vector<2x16xf32>
    %446 = arith.mulf %445, %355 : vector<2x16xf32>
    %447 = arith.addf %443, %446 : vector<2x16xf32>
    %c22_63 = arith.constant 22 : index
    %448 = memref.load %arg4[%c22_63] : memref<48xf32, #tpu.memory_space<smem>>
    %449 = vector.broadcast %448 : f32 to vector<2x16xf32>
    %450 = arith.mulf %449, %341 : vector<2x16xf32>
    %451 = arith.addf %447, %450 : vector<2x16xf32>
    %c23_64 = arith.constant 23 : index
    %452 = memref.load %arg4[%c23_64] : memref<48xf32, #tpu.memory_space<smem>>
    %453 = vector.broadcast %452 : f32 to vector<2x16xf32>
    %454 = arith.mulf %453, %357 : vector<2x16xf32>
    %455 = arith.addf %451, %454 : vector<2x16xf32>
    %cst_65 = arith.constant 0.000000e+00 : f32
    %456 = vector.broadcast %cst_65 : f32 to vector<2x16xf32>
    %c24_66 = arith.constant 24 : index
    %457 = memref.load %arg4[%c24_66] : memref<48xf32, #tpu.memory_space<smem>>
    %458 = vector.broadcast %457 : f32 to vector<2x16xf32>
    %459 = arith.mulf %458, %343 : vector<2x16xf32>
    %460 = arith.addf %456, %459 : vector<2x16xf32>
    %c25_67 = arith.constant 25 : index
    %461 = memref.load %arg4[%c25_67] : memref<48xf32, #tpu.memory_space<smem>>
    %462 = vector.broadcast %461 : f32 to vector<2x16xf32>
    %463 = arith.mulf %462, %335 : vector<2x16xf32>
    %464 = arith.addf %460, %463 : vector<2x16xf32>
    %c26_68 = arith.constant 26 : index
    %465 = memref.load %arg4[%c26_68] : memref<48xf32, #tpu.memory_space<smem>>
    %466 = vector.broadcast %465 : f32 to vector<2x16xf32>
    %467 = arith.mulf %466, %345 : vector<2x16xf32>
    %468 = arith.addf %464, %467 : vector<2x16xf32>
    %c27_69 = arith.constant 27 : index
    %469 = memref.load %arg4[%c27_69] : memref<48xf32, #tpu.memory_space<smem>>
    %470 = vector.broadcast %469 : f32 to vector<2x16xf32>
    %471 = arith.mulf %470, %347 : vector<2x16xf32>
    %472 = arith.addf %468, %471 : vector<2x16xf32>
    %c28_70 = arith.constant 28 : index
    %473 = memref.load %arg4[%c28_70] : memref<48xf32, #tpu.memory_space<smem>>
    %474 = vector.broadcast %473 : f32 to vector<2x16xf32>
    %475 = arith.mulf %474, %337 : vector<2x16xf32>
    %476 = arith.addf %472, %475 : vector<2x16xf32>
    %c29_71 = arith.constant 29 : index
    %477 = memref.load %arg4[%c29_71] : memref<48xf32, #tpu.memory_space<smem>>
    %478 = vector.broadcast %477 : f32 to vector<2x16xf32>
    %479 = arith.mulf %478, %349 : vector<2x16xf32>
    %480 = arith.addf %476, %479 : vector<2x16xf32>
    %c30_72 = arith.constant 30 : index
    %481 = memref.load %arg4[%c30_72] : memref<48xf32, #tpu.memory_space<smem>>
    %482 = vector.broadcast %481 : f32 to vector<2x16xf32>
    %483 = arith.mulf %482, %351 : vector<2x16xf32>
    %484 = arith.addf %480, %483 : vector<2x16xf32>
    %c31_73 = arith.constant 31 : index
    %485 = memref.load %arg4[%c31_73] : memref<48xf32, #tpu.memory_space<smem>>
    %486 = vector.broadcast %485 : f32 to vector<2x16xf32>
    %487 = arith.mulf %486, %339 : vector<2x16xf32>
    %488 = arith.addf %484, %487 : vector<2x16xf32>
    %c32_74 = arith.constant 32 : index
    %489 = memref.load %arg4[%c32_74] : memref<48xf32, #tpu.memory_space<smem>>
    %490 = vector.broadcast %489 : f32 to vector<2x16xf32>
    %491 = arith.mulf %490, %353 : vector<2x16xf32>
    %492 = arith.addf %488, %491 : vector<2x16xf32>
    %c33_75 = arith.constant 33 : index
    %493 = memref.load %arg4[%c33_75] : memref<48xf32, #tpu.memory_space<smem>>
    %494 = vector.broadcast %493 : f32 to vector<2x16xf32>
    %495 = arith.mulf %494, %355 : vector<2x16xf32>
    %496 = arith.addf %492, %495 : vector<2x16xf32>
    %c34_76 = arith.constant 34 : index
    %497 = memref.load %arg4[%c34_76] : memref<48xf32, #tpu.memory_space<smem>>
    %498 = vector.broadcast %497 : f32 to vector<2x16xf32>
    %499 = arith.mulf %498, %341 : vector<2x16xf32>
    %500 = arith.addf %496, %499 : vector<2x16xf32>
    %c35_77 = arith.constant 35 : index
    %501 = memref.load %arg4[%c35_77] : memref<48xf32, #tpu.memory_space<smem>>
    %502 = vector.broadcast %501 : f32 to vector<2x16xf32>
    %503 = arith.mulf %502, %357 : vector<2x16xf32>
    %504 = arith.addf %500, %503 : vector<2x16xf32>
    %cst_78 = arith.constant 0.000000e+00 : f32
    %505 = vector.broadcast %cst_78 : f32 to vector<2x16xf32>
    %c36_79 = arith.constant 36 : index
    %506 = memref.load %arg4[%c36_79] : memref<48xf32, #tpu.memory_space<smem>>
    %507 = vector.broadcast %506 : f32 to vector<2x16xf32>
    %508 = arith.mulf %507, %343 : vector<2x16xf32>
    %509 = arith.addf %505, %508 : vector<2x16xf32>
    %c37_80 = arith.constant 37 : index
    %510 = memref.load %arg4[%c37_80] : memref<48xf32, #tpu.memory_space<smem>>
    %511 = vector.broadcast %510 : f32 to vector<2x16xf32>
    %512 = arith.mulf %511, %335 : vector<2x16xf32>
    %513 = arith.addf %509, %512 : vector<2x16xf32>
    %c38_81 = arith.constant 38 : index
    %514 = memref.load %arg4[%c38_81] : memref<48xf32, #tpu.memory_space<smem>>
    %515 = vector.broadcast %514 : f32 to vector<2x16xf32>
    %516 = arith.mulf %515, %345 : vector<2x16xf32>
    %517 = arith.addf %513, %516 : vector<2x16xf32>
    %c39_82 = arith.constant 39 : index
    %518 = memref.load %arg4[%c39_82] : memref<48xf32, #tpu.memory_space<smem>>
    %519 = vector.broadcast %518 : f32 to vector<2x16xf32>
    %520 = arith.mulf %519, %347 : vector<2x16xf32>
    %521 = arith.addf %517, %520 : vector<2x16xf32>
    %c40_83 = arith.constant 40 : index
    %522 = memref.load %arg4[%c40_83] : memref<48xf32, #tpu.memory_space<smem>>
    %523 = vector.broadcast %522 : f32 to vector<2x16xf32>
    %524 = arith.mulf %523, %337 : vector<2x16xf32>
    %525 = arith.addf %521, %524 : vector<2x16xf32>
    %c41_84 = arith.constant 41 : index
    %526 = memref.load %arg4[%c41_84] : memref<48xf32, #tpu.memory_space<smem>>
    %527 = vector.broadcast %526 : f32 to vector<2x16xf32>
    %528 = arith.mulf %527, %349 : vector<2x16xf32>
    %529 = arith.addf %525, %528 : vector<2x16xf32>
    %c42_85 = arith.constant 42 : index
    %530 = memref.load %arg4[%c42_85] : memref<48xf32, #tpu.memory_space<smem>>
    %531 = vector.broadcast %530 : f32 to vector<2x16xf32>
    %532 = arith.mulf %531, %351 : vector<2x16xf32>
    %533 = arith.addf %529, %532 : vector<2x16xf32>
    %c43_86 = arith.constant 43 : index
    %534 = memref.load %arg4[%c43_86] : memref<48xf32, #tpu.memory_space<smem>>
    %535 = vector.broadcast %534 : f32 to vector<2x16xf32>
    %536 = arith.mulf %535, %339 : vector<2x16xf32>
    %537 = arith.addf %533, %536 : vector<2x16xf32>
    %c44_87 = arith.constant 44 : index
    %538 = memref.load %arg4[%c44_87] : memref<48xf32, #tpu.memory_space<smem>>
    %539 = vector.broadcast %538 : f32 to vector<2x16xf32>
    %540 = arith.mulf %539, %353 : vector<2x16xf32>
    %541 = arith.addf %537, %540 : vector<2x16xf32>
    %c45_88 = arith.constant 45 : index
    %542 = memref.load %arg4[%c45_88] : memref<48xf32, #tpu.memory_space<smem>>
    %543 = vector.broadcast %542 : f32 to vector<2x16xf32>
    %544 = arith.mulf %543, %355 : vector<2x16xf32>
    %545 = arith.addf %541, %544 : vector<2x16xf32>
    %c46_89 = arith.constant 46 : index
    %546 = memref.load %arg4[%c46_89] : memref<48xf32, #tpu.memory_space<smem>>
    %547 = vector.broadcast %546 : f32 to vector<2x16xf32>
    %548 = arith.mulf %547, %341 : vector<2x16xf32>
    %549 = arith.addf %545, %548 : vector<2x16xf32>
    %c47_90 = arith.constant 47 : index
    %550 = memref.load %arg4[%c47_90] : memref<48xf32, #tpu.memory_space<smem>>
    %551 = vector.broadcast %550 : f32 to vector<2x16xf32>
    %552 = arith.mulf %551, %357 : vector<2x16xf32>
    %553 = arith.addf %549, %552 : vector<2x16xf32>
    %554 = vector.shape_cast %406 : vector<2x16xf32> to vector<1x2x16xf32>
    %cst_91 = arith.constant dense<0.000000e+00> : vector<1xf32>
    %555 = vector.multi_reduction <add>, %554, %cst_91 [1, 2] : vector<1x2x16xf32> to vector<1xf32>
    %556 = vector.shape_cast %555 : vector<1xf32> to vector<1x1x1xf32>
    %557 = vector.extract %556[0, 0, 0] : f32 from vector<1x1x1xf32>
    %558 = vector.broadcast %557 : f32 to vector<1x1xf32>
    %cst_92 = arith.constant 3.125000e-02 : f32
    %559 = vector.broadcast %cst_92 : f32 to vector<1x1xf32>
    %560 = arith.mulf %558, %559 : vector<1x1xf32>
    %561 = vector.broadcast %560 : vector<1x1xf32> to vector<2x16xf32>
    %562 = arith.subf %406, %561 : vector<2x16xf32>
    %563 = arith.mulf %562, %562 : vector<2x16xf32>
    %564 = vector.shape_cast %563 : vector<2x16xf32> to vector<1x2x16xf32>
    %cst_93 = arith.constant dense<0.000000e+00> : vector<1xf32>
    %565 = vector.multi_reduction <add>, %564, %cst_93 [1, 2] : vector<1x2x16xf32> to vector<1xf32>
    %566 = vector.shape_cast %565 : vector<1xf32> to vector<1x1x1xf32>
    %567 = vector.extract %566[0, 0, 0] : f32 from vector<1x1x1xf32>
    %568 = vector.broadcast %567 : f32 to vector<1x1xf32>
    %cst_94 = arith.constant 3.125000e-02 : f32
    %569 = vector.broadcast %cst_94 : f32 to vector<1x1xf32>
    %570 = arith.mulf %568, %569 : vector<1x1xf32>
    %c0_95 = arith.constant 0 : index
    %571 = memref.load %arg5[%c0_95] : memref<4xf32, #tpu.memory_space<smem>>
    %cst_96 = arith.constant 9.99999974E-6 : f32
    %572 = vector.broadcast %cst_96 : f32 to vector<1x1xf32>
    %573 = arith.addf %570, %572 : vector<1x1xf32>
    %574 = math.rsqrt %573 : vector<1x1xf32>
    %575 = vector.broadcast %571 : f32 to vector<1x1xf32>
    %576 = arith.mulf %575, %574 : vector<1x1xf32>
    %577 = vector.broadcast %576 : vector<1x1xf32> to vector<2x16xf32>
    %578 = arith.mulf %562, %577 : vector<2x16xf32>
    %c0_97 = arith.constant 0 : index
    %579 = memref.load %arg6[%c0_97] : memref<4xf32, #tpu.memory_space<smem>>
    %580 = vector.broadcast %579 : f32 to vector<2x16xf32>
    %581 = arith.addf %578, %580 : vector<2x16xf32>
    %582 = vector.shape_cast %455 : vector<2x16xf32> to vector<1x2x16xf32>
    %cst_98 = arith.constant dense<0.000000e+00> : vector<1xf32>
    %583 = vector.multi_reduction <add>, %582, %cst_98 [1, 2] : vector<1x2x16xf32> to vector<1xf32>
    %584 = vector.shape_cast %583 : vector<1xf32> to vector<1x1x1xf32>
    %585 = vector.extract %584[0, 0, 0] : f32 from vector<1x1x1xf32>
    %586 = vector.broadcast %585 : f32 to vector<1x1xf32>
    %cst_99 = arith.constant 3.125000e-02 : f32
    %587 = vector.broadcast %cst_99 : f32 to vector<1x1xf32>
    %588 = arith.mulf %586, %587 : vector<1x1xf32>
    %589 = vector.broadcast %588 : vector<1x1xf32> to vector<2x16xf32>
    %590 = arith.subf %455, %589 : vector<2x16xf32>
    %591 = arith.mulf %590, %590 : vector<2x16xf32>
    %592 = vector.shape_cast %591 : vector<2x16xf32> to vector<1x2x16xf32>
    %cst_100 = arith.constant dense<0.000000e+00> : vector<1xf32>
    %593 = vector.multi_reduction <add>, %592, %cst_100 [1, 2] : vector<1x2x16xf32> to vector<1xf32>
    %594 = vector.shape_cast %593 : vector<1xf32> to vector<1x1x1xf32>
    %595 = vector.extract %594[0, 0, 0] : f32 from vector<1x1x1xf32>
    %596 = vector.broadcast %595 : f32 to vector<1x1xf32>
    %cst_101 = arith.constant 3.125000e-02 : f32
    %597 = vector.broadcast %cst_101 : f32 to vector<1x1xf32>
    %598 = arith.mulf %596, %597 : vector<1x1xf32>
    %c1_102 = arith.constant 1 : index
    %599 = memref.load %arg5[%c1_102] : memref<4xf32, #tpu.memory_space<smem>>
    %cst_103 = arith.constant 9.99999974E-6 : f32
    %600 = vector.broadcast %cst_103 : f32 to vector<1x1xf32>
    %601 = arith.addf %598, %600 : vector<1x1xf32>
    %602 = math.rsqrt %601 : vector<1x1xf32>
    %603 = vector.broadcast %599 : f32 to vector<1x1xf32>
    %604 = arith.mulf %603, %602 : vector<1x1xf32>
    %605 = vector.broadcast %604 : vector<1x1xf32> to vector<2x16xf32>
    %606 = arith.mulf %590, %605 : vector<2x16xf32>
    %c1_104 = arith.constant 1 : index
    %607 = memref.load %arg6[%c1_104] : memref<4xf32, #tpu.memory_space<smem>>
    %608 = vector.broadcast %607 : f32 to vector<2x16xf32>
    %609 = arith.addf %606, %608 : vector<2x16xf32>
    %610 = vector.shape_cast %504 : vector<2x16xf32> to vector<1x2x16xf32>
    %cst_105 = arith.constant dense<0.000000e+00> : vector<1xf32>
    %611 = vector.multi_reduction <add>, %610, %cst_105 [1, 2] : vector<1x2x16xf32> to vector<1xf32>
    %612 = vector.shape_cast %611 : vector<1xf32> to vector<1x1x1xf32>
    %613 = vector.extract %612[0, 0, 0] : f32 from vector<1x1x1xf32>
    %614 = vector.broadcast %613 : f32 to vector<1x1xf32>
    %cst_106 = arith.constant 3.125000e-02 : f32
    %615 = vector.broadcast %cst_106 : f32 to vector<1x1xf32>
    %616 = arith.mulf %614, %615 : vector<1x1xf32>
    %617 = vector.broadcast %616 : vector<1x1xf32> to vector<2x16xf32>
    %618 = arith.subf %504, %617 : vector<2x16xf32>
    %619 = arith.mulf %618, %618 : vector<2x16xf32>
    %620 = vector.shape_cast %619 : vector<2x16xf32> to vector<1x2x16xf32>
    %cst_107 = arith.constant dense<0.000000e+00> : vector<1xf32>
    %621 = vector.multi_reduction <add>, %620, %cst_107 [1, 2] : vector<1x2x16xf32> to vector<1xf32>
    %622 = vector.shape_cast %621 : vector<1xf32> to vector<1x1x1xf32>
    %623 = vector.extract %622[0, 0, 0] : f32 from vector<1x1x1xf32>
    %624 = vector.broadcast %623 : f32 to vector<1x1xf32>
    %cst_108 = arith.constant 3.125000e-02 : f32
    %625 = vector.broadcast %cst_108 : f32 to vector<1x1xf32>
    %626 = arith.mulf %624, %625 : vector<1x1xf32>
    %c2_109 = arith.constant 2 : index
    %627 = memref.load %arg5[%c2_109] : memref<4xf32, #tpu.memory_space<smem>>
    %cst_110 = arith.constant 9.99999974E-6 : f32
    %628 = vector.broadcast %cst_110 : f32 to vector<1x1xf32>
    %629 = arith.addf %626, %628 : vector<1x1xf32>
    %630 = math.rsqrt %629 : vector<1x1xf32>
    %631 = vector.broadcast %627 : f32 to vector<1x1xf32>
    %632 = arith.mulf %631, %630 : vector<1x1xf32>
    %633 = vector.broadcast %632 : vector<1x1xf32> to vector<2x16xf32>
    %634 = arith.mulf %618, %633 : vector<2x16xf32>
    %c2_111 = arith.constant 2 : index
    %635 = memref.load %arg6[%c2_111] : memref<4xf32, #tpu.memory_space<smem>>
    %636 = vector.broadcast %635 : f32 to vector<2x16xf32>
    %637 = arith.addf %634, %636 : vector<2x16xf32>
    %638 = vector.shape_cast %553 : vector<2x16xf32> to vector<1x2x16xf32>
    %cst_112 = arith.constant dense<0.000000e+00> : vector<1xf32>
    %639 = vector.multi_reduction <add>, %638, %cst_112 [1, 2] : vector<1x2x16xf32> to vector<1xf32>
    %640 = vector.shape_cast %639 : vector<1xf32> to vector<1x1x1xf32>
    %641 = vector.extract %640[0, 0, 0] : f32 from vector<1x1x1xf32>
    %642 = vector.broadcast %641 : f32 to vector<1x1xf32>
    %cst_113 = arith.constant 3.125000e-02 : f32
    %643 = vector.broadcast %cst_113 : f32 to vector<1x1xf32>
    %644 = arith.mulf %642, %643 : vector<1x1xf32>
    %645 = vector.broadcast %644 : vector<1x1xf32> to vector<2x16xf32>
    %646 = arith.subf %553, %645 : vector<2x16xf32>
    %647 = arith.mulf %646, %646 : vector<2x16xf32>
    %648 = vector.shape_cast %647 : vector<2x16xf32> to vector<1x2x16xf32>
    %cst_114 = arith.constant dense<0.000000e+00> : vector<1xf32>
    %649 = vector.multi_reduction <add>, %648, %cst_114 [1, 2] : vector<1x2x16xf32> to vector<1xf32>
    %650 = vector.shape_cast %649 : vector<1xf32> to vector<1x1x1xf32>
    %651 = vector.extract %650[0, 0, 0] : f32 from vector<1x1x1xf32>
    %652 = vector.broadcast %651 : f32 to vector<1x1xf32>
    %cst_115 = arith.constant 3.125000e-02 : f32
    %653 = vector.broadcast %cst_115 : f32 to vector<1x1xf32>
    %654 = arith.mulf %652, %653 : vector<1x1xf32>
    %c3_116 = arith.constant 3 : index
    %655 = memref.load %arg5[%c3_116] : memref<4xf32, #tpu.memory_space<smem>>
    %cst_117 = arith.constant 9.99999974E-6 : f32
    %656 = vector.broadcast %cst_117 : f32 to vector<1x1xf32>
    %657 = arith.addf %654, %656 : vector<1x1xf32>
    %658 = math.rsqrt %657 : vector<1x1xf32>
    %659 = vector.broadcast %655 : f32 to vector<1x1xf32>
    %660 = arith.mulf %659, %658 : vector<1x1xf32>
    %661 = vector.broadcast %660 : vector<1x1xf32> to vector<2x16xf32>
    %662 = arith.mulf %646, %661 : vector<2x16xf32>
    %c3_118 = arith.constant 3 : index
    %663 = memref.load %arg6[%c3_118] : memref<4xf32, #tpu.memory_space<smem>>
    %664 = vector.broadcast %663 : f32 to vector<2x16xf32>
    %665 = arith.addf %662, %664 : vector<2x16xf32>
    %666 = arith.addf %581, %2 : vector<2x16xf32>
    %cst_119 = arith.constant 0.000000e+00 : f32
    %667 = vector.broadcast %cst_119 : f32 to vector<2x16xf32>
    %668 = arith.maximumf %666, %667 : vector<2x16xf32>
    %669 = arith.addf %609, %4 : vector<2x16xf32>
    %cst_120 = arith.constant 0.000000e+00 : f32
    %670 = vector.broadcast %cst_120 : f32 to vector<2x16xf32>
    %671 = arith.maximumf %669, %670 : vector<2x16xf32>
    %672 = arith.addf %637, %6 : vector<2x16xf32>
    %cst_121 = arith.constant 0.000000e+00 : f32
    %673 = vector.broadcast %cst_121 : f32 to vector<2x16xf32>
    %674 = arith.maximumf %672, %673 : vector<2x16xf32>
    %675 = arith.addf %665, %8 : vector<2x16xf32>
    %cst_122 = arith.constant 0.000000e+00 : f32
    %676 = vector.broadcast %cst_122 : f32 to vector<2x16xf32>
    %677 = arith.maximumf %675, %676 : vector<2x16xf32>
    %678 = vector.shape_cast %668 : vector<2x16xf32> to vector<2x1x16xf32>
    %679 = vector.shape_cast %671 : vector<2x16xf32> to vector<2x1x16xf32>
    %680 = vector.shape_cast %674 : vector<2x16xf32> to vector<2x1x16xf32>
    %681 = vector.shape_cast %677 : vector<2x16xf32> to vector<2x1x16xf32>
    %682 = tpu.concatenate %678, %679, %680, %681 in 1 : vector<2x1x16xf32>, vector<2x1x16xf32>, vector<2x1x16xf32>, vector<2x1x16xf32> -> vector<2x4x16xf32>
    %c0_123 = arith.constant 0 : index
    %c0_124 = arith.constant 0 : index
    %c0_125 = arith.constant 0 : index
    %683 = vector.load %arg7[%c0_123, %c0_124, %c0_125] : memref<2x4x16xf32, #tpu.memory_space<vmem>>, vector<2x4x16xf32>
    tpu.vector_store %arg7[%c0_123, %c0_124, %c0_125], %682 {strides = array<i32>} : memref<2x4x16xf32, #tpu.memory_space<vmem>>, vector<2x4x16xf32>,
    return
  }
}

</mosaic_0001>

<llo_original>
// kernel: tpu_custom_call.1
$region0: #{tpu_custom_call.1}
  #allocation0 [shape = 'u32[]', space=smem, size = 0x4, offset = 0x4, fixed_abs, tag = 'smem constant byte address 0x4 - core index']
  #allocation1 [shape = 'u32[144,128]{1,0:T(1,128)}', space=vmem, size = 0x12000, scoped, tag = 'internal scratch']
  %s0 = inlined_call_operand.hbm [shape: f32[2,4,16], index: 0, kind: input, shape index: {}]
  %s1 = inlined_call_operand.vmem [shape: f32[48], index: 1, kind: input, shape index: {}]
  %s2 = inlined_call_operand.vmem [shape: f32[4], index: 2, kind: input, shape index: {}]
  %s3 = inlined_call_operand.vmem [shape: f32[4], index: 3, kind: input, shape index: {}]
  %s4 = inlined_call_operand.vmem [shape: f32[48], index: 4, kind: input, shape index: {}]
  %s5 = inlined_call_operand.vmem [shape: f32[4], index: 5, kind: input, shape index: {}]
  %s6 = inlined_call_operand.vmem [shape: f32[4], index: 6, kind: input, shape index: {}]
  %s7 = inlined_call_operand.hbm [shape: f32[2,4,16], index: 7, kind: output, shape index: {}]
  %s8 = sld [smem:[#allocation0]]
  $region66: #{tpu_custom_call.1} parent=0
    _
  %s10 = ssub.s32 1, %s8
  %s11 = scalar_select 0, %s10, %s8
  $region1: #{tpu_custom_call.1} parent=0
    #allocation2 [shape = 'u8[4096]{0}', space=vmem, size = 0x1000, scoped, tag = 'input window, operand 0, single buffered']
    #allocation3 [shape = 's32[1]{0}', space=sflag, size = 0x4, scoped, tag = 'scoped memory for tpu_custom_call.1']
    #allocation4 [shape = 's32[1]{0}', space=sflag, size = 0x4, scoped, tag = 'scoped memory for tpu_custom_call.1']
    #allocation5 [shape = 's32[1]{0}', space=sflag, size = 0x4, scoped, tag = 'scoped memory for tpu_custom_call.1']
    #allocation6 [shape = 'u8[512]{0}', space=smem, size = 0x200, scoped, tag = 'input window, operand 1, single buffered']
    #allocation7 [shape = 'u8[512]{0}', space=smem, size = 0x200, scoped, tag = 'input window, operand 2, single buffered']
    #allocation8 [shape = 's32[1]{0}', space=sflag, size = 0x4, scoped, tag = 'scoped memory for tpu_custom_call.1']
    #allocation9 [shape = 'u8[512]{0}', space=smem, size = 0x200, scoped, tag = 'input window, operand 3, single buffered']
    #allocation10 [shape = 'u8[512]{0}', space=smem, size = 0x200, scoped, tag = 'input window, operand 4, single buffered']
    #allocation11 [shape = 's32[1]{0}', space=sflag, size = 0x4, scoped, tag = 'scoped memory for tpu_custom_call.1']
    #allocation12 [shape = 'u8[512]{0}', space=smem, size = 0x200, scoped, tag = 'input window, operand 5, single buffered']
    #allocation13 [shape = 'u8[512]{0}', space=smem, size = 0x200, scoped, tag = 'input window, operand 6, single buffered']
    #allocation14 [shape = 's32[1]{0}', space=sflag, size = 0x4, scoped, tag = 'scoped memory for tpu_custom_call.1']
    #allocation15 [shape = 'u8[4096]{0}', space=vmem, size = 0x1000, scoped, tag = 'output window, operand 0, single buffered']
    %12 = vsyncpa [#allocation3], 0
    %13 = vsyncpa [#allocation5], 0
    %14 = vsyncpa [#allocation8], 0
    %15 = vsyncpa [#allocation11], 0
    %16 = vsyncpa [#allocation14], 0
    %17 = vsyncpa [#allocation4], 0
    // Predicated region
    $region2: #{tpu_custom_call.1} parent=1 // pred_check
      _
    $region3: #{tpu_custom_call.1} parent=1 // pred_check_branch
      %19 = sbr.rel (0) target = $region5
    $region4: #{tpu_custom_call.1} parent=1 // pred_region
      %s21 = ssub.s32 128, 128
      %22 = vsyncadd [#allocation3], %s21
      %s23 = sshll.u32 [#allocation2], 4
      %s24 = int_to_ptr.vmem [resolvable:$true] %s23
      %29 = dma.hbm_to_vmem [thread:$0]  %s0, 128, %s24, [#allocation3], 64, 64, 4
    $region5: #{tpu_custom_call.1} parent=1 // pred_fallthru
      _
    // Predicated region
    $region6: #{tpu_custom_call.1} parent=1 // pred_check
      _
    $region7: #{tpu_custom_call.1} parent=1 // pred_check_branch
      %31 = sbr.rel (0) target = $region9
    $region8: #{tpu_custom_call.1} parent=1 // pred_region
      %s33 = ssub.s32 16, 16
      %34 = vsyncadd [#allocation5], %s33
      %s36 = sshll.u32 %s1, 4
      %s37 = int_to_ptr.vmem [resolvable:$true] %s36
      %39 = dma.vmem_to_smem %s37, 16, [#allocation6], [#allocation5]
    $region9: #{tpu_custom_call.1} parent=1 // pred_fallthru
      _
    // Predicated region
    $region10: #{tpu_custom_call.1} parent=1 // pred_check
      _
    $region11: #{tpu_custom_call.1} parent=1 // pred_check_branch
      %41 = sbr.rel (0) target = $region13
    $region12: #{tpu_custom_call.1} parent=1 // pred_region
      %s43 = ssub.s32 16, 16
      %44 = vsyncadd [#allocation8], %s43
      %s46 = sshll.u32 %s2, 4
      %s47 = int_to_ptr.vmem [resolvable:$true] %s46
      %49 = dma.vmem_to_smem %s47, 16, [#allocation7], [#allocation8]
    $region13: #{tpu_custom_call.1} parent=1 // pred_fallthru
      _
    // Predicated region
    $region14: #{tpu_custom_call.1} parent=1 // pred_check
      _
    $region15: #{tpu_custom_call.1} parent=1 // pred_check_branch
      %51 = sbr.rel (0) target = $region17
    $region16: #{tpu_custom_call.1} parent=1 // pred_region
      %s53 = ssub.s32 16, 16
      %54 = vsyncadd [#allocation8], %s53
      %s56 = sshll.u32 %s3, 4
      %s57 = int_to_ptr.vmem [resolvable:$true] %s56
      %59 = dma.vmem_to_smem %s57, 16, [#allocation9], [#allocation8]
    $region17: #{tpu_custom_call.1} parent=1 // pred_fallthru
      _
    // Predicated region
    $region18: #{tpu_custom_call.1} parent=1 // pred_check
      _
    $region19: #{tpu_custom_call.1} parent=1 // pred_check_branch
      %61 = sbr.rel (0) target = $region21
    $region20: #{tpu_custom_call.1} parent=1 // pred_region
      %s63 = ssub.s32 16, 16
      %64 = vsyncadd [#allocation11], %s63
      %s66 = sshll.u32 %s4, 4
      %s67 = int_to_ptr.vmem [resolvable:$true] %s66
      %69 = dma.vmem_to_smem %s67, 16, [#allocation10], [#allocation11]
    $region21: #{tpu_custom_call.1} parent=1 // pred_fallthru
      _
    // Predicated region
    $region22: #{tpu_custom_call.1} parent=1 // pred_check
      _
    $region23: #{tpu_custom_call.1} parent=1 // pred_check_branch
      %71 = sbr.rel (0) target = $region25
    $region24: #{tpu_custom_call.1} parent=1 // pred_region
      %s73 = ssub.s32 16, 16
      %74 = vsyncadd [#allocation11], %s73
      %s76 = sshll.u32 %s5, 4
      %s77 = int_to_ptr.vmem [resolvable:$true] %s76
      %79 = dma.vmem_to_smem %s77, 16, [#allocation12], [#allocation11]
    $region25: #{tpu_custom_call.1} parent=1 // pred_fallthru
      _
    // Predicated region
    $region26: #{tpu_custom_call.1} parent=1 // pred_check
      _
    $region27: #{tpu_custom_call.1} parent=1 // pred_check_branch
      %81 = sbr.rel (0) target = $region29
    $region28: #{tpu_custom_call.1} parent=1 // pred_region
      %s83 = ssub.s32 16, 16
      %84 = vsyncadd [#allocation14], %s83
      %s86 = sshll.u32 %s6, 4
      %s87 = int_to_ptr.vmem [resolvable:$true] %s86
      %89 = dma.vmem_to_smem %s87, 16, [#allocation13], [#allocation14]
    $region29: #{tpu_custom_call.1} parent=1 // pred_fallthru
      _
    // Predicated region
    $region30: #{tpu_custom_call.1} parent=1 // pred_check
      _
    $region31: #{tpu_custom_call.1} parent=1 // pred_check_branch
      %91 = sbr.rel (0) target = $region33
    $region32: #{tpu_custom_call.1} parent=1 // pred_region
      %92 = dma.done [#allocation3], 128
    $region33: #{tpu_custom_call.1} parent=1 // pred_fallthru
      _
    // Predicated region
    $region34: #{tpu_custom_call.1} parent=1 // pred_check
      _
    $region35: #{tpu_custom_call.1} parent=1 // pred_check_branch
      %94 = sbr.rel (0) target = $region37
    $region36: #{tpu_custom_call.1} parent=1 // pred_region
      %95 = dma.done [#allocation5], 16
    $region37: #{tpu_custom_call.1} parent=1 // pred_fallthru
      _
    // Predicated region
    $region38: #{tpu_custom_call.1} parent=1 // pred_check
      _
    $region39: #{tpu_custom_call.1} parent=1 // pred_check_branch
      %97 = sbr.rel (0) target = $region41
    $region40: #{tpu_custom_call.1} parent=1 // pred_region
      %98 = dma.done [#allocation8], 16
    $region41: #{tpu_custom_call.1} parent=1 // pred_fallthru
      _
    // Predicated region
    $region42: #{tpu_custom_call.1} parent=1 // pred_check
      _
    $region43: #{tpu_custom_call.1} parent=1 // pred_check_branch
      %100 = sbr.rel (0) target = $region45
    $region44: #{tpu_custom_call.1} parent=1 // pred_region
      %101 = dma.done [#allocation8], 16
    $region45: #{tpu_custom_call.1} parent=1 // pred_fallthru
      _
    // Predicated region
    $region46: #{tpu_custom_call.1} parent=1 // pred_check
      _
    $region47: #{tpu_custom_call.1} parent=1 // pred_check_branch
      %103 = sbr.rel (0) target = $region49
    $region48: #{tpu_custom_call.1} parent=1 // pred_region
      %104 = dma.done [#allocation11], 16
    $region49: #{tpu_custom_call.1} parent=1 // pred_fallthru
      _
    // Predicated region
    $region50: #{tpu_custom_call.1} parent=1 // pred_check
      _
    $region51: #{tpu_custom_call.1} parent=1 // pred_check_branch
      %106 = sbr.rel (0) target = $region53
    $region52: #{tpu_custom_call.1} parent=1 // pred_region
      %107 = dma.done [#allocation11], 16
    $region53: #{tpu_custom_call.1} parent=1 // pred_fallthru
      _
    // Predicated region
    $region54: #{tpu_custom_call.1} parent=1 // pred_check
      _
    $region55: #{tpu_custom_call.1} parent=1 // pred_check_branch
      %109 = sbr.rel (0) target = $region57
    $region56: #{tpu_custom_call.1} parent=1 // pred_region
      %110 = dma.done [#allocation14], 16
    $region57: #{tpu_custom_call.1} parent=1 // pred_fallthru
      _
    %111 = sfence
    %v112 = vld [vmem:[#allocation2] sm:$0xf]
    %v113 = vld [vmem:[#allocation2 + $0x4] sm:$0xf]
    %v116 = vrot.slane %v113, 7
    %vm117 = vcmask 1041409
    %v118 = vsel %vm117, %v116, %v112
    %119 = vrot.lane.b32.xlu0 %v118, 1
    %v120 = vpop.permute.xlu0 %119
    %vm122 = vcmask 7168
    %v123 = vsel %vm122, 0.0, %v120
    %124 = vrot.lane.b32.xlu0 %v118, 127
    %v125 = vpop.permute.xlu0 %124
    %vm127 = vcmask 121856
    %v128 = vsel %vm127, %v125, 0.0
    %v129 = vrot.slane %v112, 1
    %v130 = vsel %vm117, %v113, %v129
    %131 = vrot.lane.b32.xlu0 %v130, 1
    %v132 = vpop.permute.xlu0 %131
    %v134 = vsel %vm122, 0.0, %v132
    %vm135 = vcmask 1042434
    %v136 = vsel %vm135, %v116, %v112
    %137 = vrot.lane.b32.xlu0 %v136, 127
    %v138 = vpop.permute.xlu0 %137
    %v140 = vsel %vm127, %v138, 0.0
    %v141 = vrot.slane %v112, 2
    %v142 = vrot.slane %v113, 1
    %v143 = vsel %vm117, %v142, %v141
    %144 = vrot.lane.b32.xlu0 %v143, 1
    %v145 = vpop.permute.xlu0 %144
    %v147 = vsel %vm122, 0.0, %v145
    %vm148 = vcmask 1043459
    %v149 = vsel %vm148, %v116, %v112
    %150 = vrot.lane.b32.xlu0 %v149, 127
    %v151 = vpop.permute.xlu0 %150
    %v153 = vsel %vm127, %v151, 0.0
    %v154 = vrot.slane %v112, 3
    %v155 = vrot.slane %v113, 2
    %v156 = vsel %vm117, %v155, %v154
    %157 = vrot.lane.b32.xlu0 %v156, 1
    %v158 = vpop.permute.xlu0 %157
    %v160 = vsel %vm122, 0.0, %v158
    %vm161 = vcmask 1044484
    %v162 = vsel %vm161, %v116, %v112
    %163 = vrot.lane.b32.xlu0 %v162, 127
    %v164 = vpop.permute.xlu0 %163
    %v166 = vsel %vm127, %v164, 0.0
    %s167 = sld [smem:[#allocation6]]
    %v168 = vstv %s167
    %v169 = vmul.f32 %v168, %v123
    %v170 = vadd.f32 %v169, 0.0
    %s171 = sld [smem:[#allocation6 + $0x1]]
    %v172 = vstv %s171
    %v173 = vmul.f32 %v172, %v112
    %v174 = vmul.f32 %v172, %v113
    %v177 = vrot.slane %v174, 7
    %v178 = vsel %vm117, %v177, %v173
    %v180 = vadd.f32 %v170, %v178
    %s181 = sld [smem:[#allocation6 + $0x2]]
    %v182 = vstv %s181
    %v183 = vmul.f32 %v182, %v128
    %v184 = vadd.f32 %v180, %v183
    %s185 = sld [smem:[#allocation6 + $0x3]]
    %v186 = vstv %s185
    %v187 = vmul.f32 %v186, %v134
    %v188 = vadd.f32 %v184, %v187
    %s189 = sld [smem:[#allocation6 + $0x4]]
    %v190 = vstv %s189
    %v191 = vmul.f32 %v190, %v112
    %v192 = vmul.f32 %v190, %v113
    %v195 = vrot.slane %v191, 1
    %v196 = vsel %vm117, %v192, %v195
    %v198 = vadd.f32 %v188, %v196
    %s199 = sld [smem:[#allocation6 + $0x5]]
    %v200 = vstv %s199
    %v201 = vmul.f32 %v200, %v140
    %v203 = vrot.slane %v201, 1
    %v205 = vadd.f32 %v198, %v203
    %s206 = sld [smem:[#allocation6 + $0x6]]
    %v207 = vstv %s206
    %v208 = vmul.f32 %v207, %v147
    %v209 = vadd.f32 %v205, %v208
    %s210 = sld [smem:[#allocation6 + $0x7]]
    %v211 = vstv %s210
    %v212 = vmul.f32 %v211, %v112
    %v213 = vmul.f32 %v211, %v113
    %v216 = vrot.slane %v212, 2
    %v217 = vrot.slane %v213, 1
    %v218 = vsel %vm117, %v217, %v216
    %v220 = vadd.f32 %v209, %v218
    %s221 = sld [smem:[#allocation6 + $0x8]]
    %v222 = vstv %s221
    %v223 = vmul.f32 %v222, %v153
    %v225 = vrot.slane %v223, 2
    %v227 = vadd.f32 %v220, %v225
    %s228 = sld [smem:[#allocation6 + $0x9]]
    %v229 = vstv %s228
    %v230 = vmul.f32 %v229, %v160
    %v231 = vadd.f32 %v227, %v230
    %s232 = sld [smem:[#allocation6 + $0xa]]
    %v233 = vstv %s232
    %v234 = vmul.f32 %v233, %v112
    %v235 = vmul.f32 %v233, %v113
    %v238 = vrot.slane %v234, 3
    %v239 = vrot.slane %v235, 2
    %v240 = vsel %vm117, %v239, %v238
    %v242 = vadd.f32 %v231, %v240
    %s243 = sld [smem:[#allocation6 + $0xb]]
    %v244 = vstv %s243
    %v245 = vmul.f32 %v244, %v166
    %v247 = vrot.slane %v245, 3
    %v249 = vadd.f32 %v242, %v247
    %s250 = sld [smem:[#allocation6 + $0xc]]
    %v251 = vstv %s250
    %v252 = vmul.f32 %v251, %v123
    %v253 = vadd.f32 %v252, 0.0
    %s254 = sld [smem:[#allocation6 + $0xd]]
    %v255 = vstv %s254
    %v256 = vmul.f32 %v255, %v112
    %v257 = vmul.f32 %v255, %v113
    %v260 = vrot.slane %v257, 7
    %v261 = vsel %vm117, %v260, %v256
    %v263 = vadd.f32 %v253, %v261
    %s264 = sld [smem:[#allocation6 + $0xe]]
    %v265 = vstv %s264
    %v266 = vmul.f32 %v265, %v128
    %v267 = vadd.f32 %v263, %v266
    %s268 = sld [smem:[#allocation6 + $0xf]]
    %v269 = vstv %s268
    %v270 = vmul.f32 %v269, %v134
    %v271 = vadd.f32 %v267, %v270
    %s272 = sld [smem:[#allocation6 + $0x10]]
    %v273 = vstv %s272
    %v274 = vmul.f32 %v273, %v112
    %v275 = vmul.f32 %v273, %v113
    %v278 = vrot.slane %v274, 1
    %v279 = vsel %vm117, %v275, %v278
    %v281 = vadd.f32 %v271, %v279
    %s282 = sld [smem:[#allocation6 + $0x11]]
    %v283 = vstv %s282
    %v284 = vmul.f32 %v283, %v140
    %v286 = vrot.slane %v284, 1
    %v288 = vadd.f32 %v281, %v286
    %s289 = sld [smem:[#allocation6 + $0x12]]
    %v290 = vstv %s289
    %v291 = vmul.f32 %v290, %v147
    %v292 = vadd.f32 %v288, %v291
    %s293 = sld [smem:[#allocation6 + $0x13]]
    %v294 = vstv %s293
    %v295 = vmul.f32 %v294, %v112
    %v296 = vmul.f32 %v294, %v113
    %v299 = vrot.slane %v295, 2
    %v300 = vrot.slane %v296, 1
    %v301 = vsel %vm117, %v300, %v299
    %v303 = vadd.f32 %v292, %v301
    %s304 = sld [smem:[#allocation6 + $0x14]]
    %v305 = vstv %s304
    %v306 = vmul.f32 %v305, %v153
    %v308 = vrot.slane %v306, 2
    %v310 = vadd.f32 %v303, %v308
    %s311 = sld [smem:[#allocation6 + $0x15]]
    %v312 = vstv %s311
    %v313 = vmul.f32 %v312, %v160
    %v314 = vadd.f32 %v310, %v313
    %s315 = sld [smem:[#allocation6 + $0x16]]
    %v316 = vstv %s315
    %v317 = vmul.f32 %v316, %v112
    %v318 = vmul.f32 %v316, %v113
    %v321 = vrot.slane %v317, 3
    %v322 = vrot.slane %v318, 2
    %v323 = vsel %vm117, %v322, %v321
    %v325 = vadd.f32 %v314, %v323
    %s326 = sld [smem:[#allocation6 + $0x17]]
    %v327 = vstv %s326
    %v328 = vmul.f32 %v327, %v166
    %v330 = vrot.slane %v328, 3
    %v332 = vadd.f32 %v325, %v330
    %s333 = sld [smem:[#allocation6 + $0x18]]
    %v334 = vstv %s333
    %v335 = vmul.f32 %v334, %v123
    %v336 = vadd.f32 %v335, 0.0
    %s337 = sld [smem:[#allocation6 + $0x19]]
    %v338 = vstv %s337
    %v339 = vmul.f32 %v338, %v112
    %v340 = vmul.f32 %v338, %v113
    %v343 = vrot.slane %v340, 7
    %v344 = vsel %vm117, %v343, %v339
    %v346 = vadd.f32 %v336, %v344
    %s347 = sld [smem:[#allocation6 + $0x1a]]
    %v348 = vstv %s347
    %v349 = vmul.f32 %v348, %v128
    %v350 = vadd.f32 %v346, %v349
    %s351 = sld [smem:[#allocation6 + $0x1b]]
    %v352 = vstv %s351
    %v353 = vmul.f32 %v352, %v134
    %v354 = vadd.f32 %v350, %v353
    %s355 = sld [smem:[#allocation6 + $0x1c]]
    %v356 = vstv %s355
    %v357 = vmul.f32 %v356, %v112
    %v358 = vmul.f32 %v356, %v113
    %v361 = vrot.slane %v357, 1
    %v362 = vsel %vm117, %v358, %v361
    %v364 = vadd.f32 %v354, %v362
    %s365 = sld [smem:[#allocation6 + $0x1d]]
    %v366 = vstv %s365
    %v367 = vmul.f32 %v366, %v140
    %v369 = vrot.slane %v367, 1
    %v371 = vadd.f32 %v364, %v369
    %s372 = sld [smem:[#allocation6 + $0x1e]]
    %v373 = vstv %s372
    %v374 = vmul.f32 %v373, %v147
    %v375 = vadd.f32 %v371, %v374
    %s376 = sld [smem:[#allocation6 + $0x1f]]
    %v377 = vstv %s376
    %v378 = vmul.f32 %v377, %v112
    %v379 = vmul.f32 %v377, %v113
    %v382 = vrot.slane %v378, 2
    %v383 = vrot.slane %v379, 1
    %v384 = vsel %vm117, %v383, %v382
    %v386 = vadd.f32 %v375, %v384
    %s387 = sld [smem:[#allocation6 + $0x20]]
    %v388 = vstv %s387
    %v389 = vmul.f32 %v388, %v153
    %v391 = vrot.slane %v389, 2
    %v393 = vadd.f32 %v386, %v391
    %s394 = sld [smem:[#allocation6 + $0x21]]
    %v395 = vstv %s394
    %v396 = vmul.f32 %v395, %v160
    %v397 = vadd.f32 %v393, %v396
    %s398 = sld [smem:[#allocation6 + $0x22]]
    %v399 = vstv %s398
    %v400 = vmul.f32 %v399, %v112
    %v401 = vmul.f32 %v399, %v113
    %v404 = vrot.slane %v400, 3
    %v405 = vrot.slane %v401, 2
    %v406 = vsel %vm117, %v405, %v404
    %v408 = vadd.f32 %v397, %v406
    %s409 = sld [smem:[#allocation6 + $0x23]]
    %v410 = vstv %s409
    %v411 = vmul.f32 %v410, %v166
    %v413 = vrot.slane %v411, 3
    %v415 = vadd.f32 %v408, %v413
    %s416 = sld [smem:[#allocation6 + $0x24]]
    %v417 = vstv %s416
    %v418 = vmul.f32 %v417, %v123
    %v419 = vadd.f32 %v418, 0.0
    %s420 = sld [smem:[#allocation6 + $0x25]]
    %v421 = vstv %s420
    %v422 = vmul.f32 %v421, %v112
    %v423 = vmul.f32 %v421, %v113
    %v426 = vrot.slane %v423, 7
    %v427 = vsel %vm117, %v426, %v422
    %v429 = vadd.f32 %v419, %v427
    %s430 = sld [smem:[#allocation6 + $0x26]]
    %v431 = vstv %s430
    %v432 = vmul.f32 %v431, %v128
    %v433 = vadd.f32 %v429, %v432
    %s434 = sld [smem:[#allocation6 + $0x27]]
    %v435 = vstv %s434
    %v436 = vmul.f32 %v435, %v134
    %v437 = vadd.f32 %v433, %v436
    %s438 = sld [smem:[#allocation6 + $0x28]]
    %v439 = vstv %s438
    %v440 = vmul.f32 %v439, %v112
    %v441 = vmul.f32 %v439, %v113
    %v444 = vrot.slane %v440, 1
    %v445 = vsel %vm117, %v441, %v444
    %v447 = vadd.f32 %v437, %v445
    %s448 = sld [smem:[#allocation6 + $0x29]]
    %v449 = vstv %s448
    %v450 = vmul.f32 %v449, %v140
    %v452 = vrot.slane %v450, 1
    %v454 = vadd.f32 %v447, %v452
    %s455 = sld [smem:[#allocation6 + $0x2a]]
    %v456 = vstv %s455
    %v457 = vmul.f32 %v456, %v147
    %v458 = vadd.f32 %v454, %v457
    %s459 = sld [smem:[#allocation6 + $0x2b]]
    %v460 = vstv %s459
    %v461 = vmul.f32 %v460, %v112
    %v462 = vmul.f32 %v460, %v113
    %v465 = vrot.slane %v461, 2
    %v466 = vrot.slane %v462, 1
    %v467 = vsel %vm117, %v466, %v465
    %v469 = vadd.f32 %v458, %v467
    %s470 = sld [smem:[#allocation6 + $0x2c]]
    %v471 = vstv %s470
    %v472 = vmul.f32 %v471, %v153
    %v474 = vrot.slane %v472, 2
    %v476 = vadd.f32 %v469, %v474
    %s477 = sld [smem:[#allocation6 + $0x2d]]
    %v478 = vstv %s477
    %v479 = vmul.f32 %v478, %v160
    %v480 = vadd.f32 %v476, %v479
    %s481 = sld [smem:[#allocation6 + $0x2e]]
    %v482 = vstv %s481
    %v483 = vmul.f32 %v482, %v112
    %v484 = vmul.f32 %v482, %v113
    %v487 = vrot.slane %v483, 3
    %v488 = vrot.slane %v484, 2
    %v489 = vsel %vm117, %v488, %v487
    %v491 = vadd.f32 %v480, %v489
    %s492 = sld [smem:[#allocation6 + $0x2f]]
    %v493 = vstv %s492
    %v494 = vmul.f32 %v493, %v166
    %v496 = vrot.slane %v494, 3
    %v498 = vadd.f32 %v491, %v496
    %vm499 = vcmask 123904
    %v500 = vsel %vm499, %v249, 0.0
    %501 = vadd.xlane.f32.xlu0 %v500
    %v502 = vpop.xlane.xlu0 %501
    %v503 = vrot.slane %v502, 4
    %v504 = vadd.f32 %v502, %v503
    %v505 = vrot.slane %v504, 2
    %v506 = vadd.f32 %v504, %v505
    %v507 = vrot.slane %v506, 1
    %v508 = vadd.f32 %v506, %v507
    %s509 = vtos %v508
    %v510 = vstv %s509
    %v511 = vmul.f32 %v510, 0.03125
    %v512 = vsub.f32 %v249, %v511
    %v513 = vmul.f32 %v512, %v512
    %v514 = vsel %vm499, %v513, 0.0
    %515 = vadd.xlane.f32.xlu0 %v514
    %v516 = vpop.xlane.xlu0 %515
    %v517 = vrot.slane %v516, 4
    %v518 = vadd.f32 %v516, %v517
    %v519 = vrot.slane %v518, 2
    %v520 = vadd.f32 %v518, %v519
    %v521 = vrot.slane %v520, 1
    %v522 = vadd.f32 %v520, %v521
    %s523 = vtos %v522
    %v524 = vstv %s523
    %v525 = vmul.f32 %v524, 0.03125
    %s526 = sld [smem:[#allocation7]]
    %v527 = vadd.f32 %v525, 1e-05
    %v528 = vrsqrt.pop %v527
    %v529 = vstv %s526
    %v530 = vmul.f32 %v529, %v528
    %v531 = vmul.f32 %v512, %v530
    %s532 = sld [smem:[#allocation9]]
    %v533 = vstv %s532
    %v534 = vadd.f32 %v531, %v533
    %v535 = vsel %vm499, %v332, 0.0
    %536 = vadd.xlane.f32.xlu0 %v535
    %v537 = vpop.xlane.xlu0 %536
    %v538 = vrot.slane %v537, 4
    %v539 = vadd.f32 %v537, %v538
    %v540 = vrot.slane %v539, 2
    %v541 = vadd.f32 %v539, %v540
    %v542 = vrot.slane %v541, 1
    %v543 = vadd.f32 %v541, %v542
    %s544 = vtos %v543
    %v545 = vstv %s544
    %v546 = vmul.f32 %v545, 0.03125
    %v547 = vsub.f32 %v332, %v546
    %v548 = vmul.f32 %v547, %v547
    %v549 = vsel %vm499, %v548, 0.0
    %550 = vadd.xlane.f32.xlu0 %v549
    %v551 = vpop.xlane.xlu0 %550
    %v552 = vrot.slane %v551, 4
    %v553 = vadd.f32 %v551, %v552
    %v554 = vrot.slane %v553, 2
    %v555 = vadd.f32 %v553, %v554
    %v556 = vrot.slane %v555, 1
    %v557 = vadd.f32 %v555, %v556
    %s558 = vtos %v557
    %v559 = vstv %s558
    %v560 = vmul.f32 %v559, 0.03125
    %s561 = sld [smem:[#allocation7 + $0x1]]
    %v562 = vadd.f32 %v560, 1e-05
    %v563 = vrsqrt.pop %v562
    %v564 = vstv %s561
    %v565 = vmul.f32 %v564, %v563
    %v566 = vmul.f32 %v547, %v565
    %s567 = sld [smem:[#allocation9 + $0x1]]
    %v568 = vstv %s567
    %v569 = vadd.f32 %v566, %v568
    %v570 = vsel %vm499, %v415, 0.0
    %571 = vadd.xlane.f32.xlu0 %v570
    %v572 = vpop.xlane.xlu0 %571
    %v573 = vrot.slane %v572, 4
    %v574 = vadd.f32 %v572, %v573
    %v575 = vrot.slane %v574, 2
    %v576 = vadd.f32 %v574, %v575
    %v577 = vrot.slane %v576, 1
    %v578 = vadd.f32 %v576, %v577
    %s579 = vtos %v578
    %v580 = vstv %s579
    %v581 = vmul.f32 %v580, 0.03125
    %v582 = vsub.f32 %v415, %v581
    %v583 = vmul.f32 %v582, %v582
    %v584 = vsel %vm499, %v583, 0.0
    %585 = vadd.xlane.f32.xlu0 %v584
    %v586 = vpop.xlane.xlu0 %585
    %v587 = vrot.slane %v586, 4
    %v588 = vadd.f32 %v586, %v587
    %v589 = vrot.slane %v588, 2
    %v590 = vadd.f32 %v588, %v589
    %v591 = vrot.slane %v590, 1
    %v592 = vadd.f32 %v590, %v591
    %s593 = vtos %v592
    %v594 = vstv %s593
    %v595 = vmul.f32 %v594, 0.03125
    %s596 = sld [smem:[#allocation7 + $0x2]]
    %v597 = vadd.f32 %v595, 1e-05
    %v598 = vrsqrt.pop %v597
    %v599 = vstv %s596
    %v600 = vmul.f32 %v599, %v598
    %v601 = vmul.f32 %v582, %v600
    %s602 = sld [smem:[#allocation9 + $0x2]]
    %v603 = vstv %s602
    %v604 = vadd.f32 %v601, %v603
    %v605 = vsel %vm499, %v498, 0.0
    %606 = vadd.xlane.f32.xlu0 %v605
    %v607 = vpop.xlane.xlu0 %606
    %v608 = vrot.slane %v607, 4
    %v609 = vadd.f32 %v607, %v608
    %v610 = vrot.slane %v609, 2
    %v611 = vadd.f32 %v609, %v610
    %v612 = vrot.slane %v611, 1
    %v613 = vadd.f32 %v611, %v612
    %s614 = vtos %v613
    %v615 = vstv %s614
    %v616 = vmul.f32 %v615, 0.03125
    %v617 = vsub.f32 %v498, %v616
    %v618 = vmul.f32 %v617, %v617
    %v619 = vsel %vm499, %v618, 0.0
    %620 = vadd.xlane.f32.xlu0 %v619
    %v621 = vpop.xlane.xlu0 %620
    %v622 = vrot.slane %v621, 4
    %v623 = vadd.f32 %v621, %v622
    %v624 = vrot.slane %v623, 2
    %v625 = vadd.f32 %v623, %v624
    %v626 = vrot.slane %v625, 1
    %v627 = vadd.f32 %v625, %v626
    %s628 = vtos %v627
    %v629 = vstv %s628
    %v630 = vmul.f32 %v629, 0.03125
    %s631 = sld [smem:[#allocation7 + $0x3]]
    %v632 = vadd.f32 %v630, 1e-05
    %v633 = vrsqrt.pop %v632
    %v634 = vstv %s631
    %v635 = vmul.f32 %v634, %v633
    %v636 = vmul.f32 %v617, %v635
    %s637 = sld [smem:[#allocation9 + $0x3]]
    %v638 = vstv %s637
    %v639 = vadd.f32 %v636, %v638
    %v640 = vmax.f32 %v534, 0.0
    %v641 = vmax.f32 %v569, 0.0
    %v642 = vmax.f32 %v604, 0.0
    %v643 = vmax.f32 %v639, 0.0
    %645 = vrot.lane.b32.xlu0 %v640, 1
    %v646 = vpop.permute.xlu0 %645
    %v648 = vsel %vm122, 0.0, %v646
    %649 = vrot.lane.b32.xlu0 %v640, 127
    %v650 = vpop.permute.xlu0 %649
    %v652 = vsel %vm127, %v650, 0.0
    %654 = vrot.lane.b32.xlu0 %v641, 1
    %v655 = vpop.permute.xlu0 %654
    %v657 = vsel %vm122, 0.0, %v655
    %658 = vrot.lane.b32.xlu0 %v641, 127
    %v659 = vpop.permute.xlu0 %658
    %v661 = vsel %vm127, %v659, 0.0
    %663 = vrot.lane.b32.xlu0 %v642, 1
    %v664 = vpop.permute.xlu0 %663
    %v666 = vsel %vm122, 0.0, %v664
    %667 = vrot.lane.b32.xlu0 %v642, 127
    %v668 = vpop.permute.xlu0 %667
    %v670 = vsel %vm127, %v668, 0.0
    %672 = vrot.lane.b32.xlu0 %v643, 1
    %v673 = vpop.permute.xlu0 %672
    %v675 = vsel %vm122, 0.0, %v673
    %676 = vrot.lane.b32.xlu0 %v643, 127
    %v677 = vpop.permute.xlu0 %676
    %v679 = vsel %vm127, %v677, 0.0
    %s680 = sld [smem:[#allocation10]]
    %v681 = vstv %s680
    %v682 = vmul.f32 %v681, %v648
    %v683 = vadd.f32 %v682, 0.0
    %s684 = sld [smem:[#allocation10 + $0x1]]
    %v685 = vstv %s684
    %v686 = vmul.f32 %v685, %v640
    %v687 = vadd.f32 %v683, %v686
    %s688 = sld [smem:[#allocation10 + $0x2]]
    %v689 = vstv %s688
    %v690 = vmul.f32 %v689, %v652
    %v691 = vadd.f32 %v687, %v690
    %s692 = sld [smem:[#allocation10 + $0x3]]
    %v693 = vstv %s692
    %v694 = vmul.f32 %v693, %v657
    %v695 = vadd.f32 %v691, %v694
    %s696 = sld [smem:[#allocation10 + $0x4]]
    %v697 = vstv %s696
    %v698 = vmul.f32 %v697, %v641
    %v699 = vadd.f32 %v695, %v698
    %s700 = sld [smem:[#allocation10 + $0x5]]
    %v701 = vstv %s700
    %v702 = vmul.f32 %v701, %v661
    %v703 = vadd.f32 %v699, %v702
    %s704 = sld [smem:[#allocation10 + $0x6]]
    %v705 = vstv %s704
    %v706 = vmul.f32 %v705, %v666
    %v707 = vadd.f32 %v703, %v706
    %s708 = sld [smem:[#allocation10 + $0x7]]
    %v709 = vstv %s708
    %v710 = vmul.f32 %v709, %v642
    %v711 = vadd.f32 %v707, %v710
    %s712 = sld [smem:[#allocation10 + $0x8]]
    %v713 = vstv %s712
    %v714 = vmul.f32 %v713, %v670
    %v715 = vadd.f32 %v711, %v714
    %s716 = sld [smem:[#allocation10 + $0x9]]
    %v717 = vstv %s716
    %v718 = vmul.f32 %v717, %v675
    %v719 = vadd.f32 %v715, %v718
    %s720 = sld [smem:[#allocation10 + $0xa]]
    %v721 = vstv %s720
    %v722 = vmul.f32 %v721, %v643
    %v723 = vadd.f32 %v719, %v722
    %s724 = sld [smem:[#allocation10 + $0xb]]
    %v725 = vstv %s724
    %v726 = vmul.f32 %v725, %v679
    %v727 = vadd.f32 %v723, %v726
    %s728 = sld [smem:[#allocation10 + $0xc]]
    %v729 = vstv %s728
    %v730 = vmul.f32 %v729, %v648
    %v731 = vadd.f32 %v730, 0.0
    %s732 = sld [smem:[#allocation10 + $0xd]]
    %v733 = vstv %s732
    %v734 = vmul.f32 %v733, %v640
    %v735 = vadd.f32 %v731, %v734
    %s736 = sld [smem:[#allocation10 + $0xe]]
    %v737 = vstv %s736
    %v738 = vmul.f32 %v737, %v652
    %v739 = vadd.f32 %v735, %v738
    %s740 = sld [smem:[#allocation10 + $0xf]]
    %v741 = vstv %s740
    %v742 = vmul.f32 %v741, %v657
    %v743 = vadd.f32 %v739, %v742
    %s744 = sld [smem:[#allocation10 + $0x10]]
    %v745 = vstv %s744
    %v746 = vmul.f32 %v745, %v641
    %v747 = vadd.f32 %v743, %v746
    %s748 = sld [smem:[#allocation10 + $0x11]]
    %v749 = vstv %s748
    %v750 = vmul.f32 %v749, %v661
    %v751 = vadd.f32 %v747, %v750
    %s752 = sld [smem:[#allocation10 + $0x12]]
    %v753 = vstv %s752
    %v754 = vmul.f32 %v753, %v666
    %v755 = vadd.f32 %v751, %v754
    %s756 = sld [smem:[#allocation10 + $0x13]]
    %v757 = vstv %s756
    %v758 = vmul.f32 %v757, %v642
    %v759 = vadd.f32 %v755, %v758
    %s760 = sld [smem:[#allocation10 + $0x14]]
    %v761 = vstv %s760
    %v762 = vmul.f32 %v761, %v670
    %v763 = vadd.f32 %v759, %v762
    %s764 = sld [smem:[#allocation10 + $0x15]]
    %v765 = vstv %s764
    %v766 = vmul.f32 %v765, %v675
    %v767 = vadd.f32 %v763, %v766
    %s768 = sld [smem:[#allocation10 + $0x16]]
    %v769 = vstv %s768
    %v770 = vmul.f32 %v769, %v643
    %v771 = vadd.f32 %v767, %v770
    %s772 = sld [smem:[#allocation10 + $0x17]]
    %v773 = vstv %s772
    %v774 = vmul.f32 %v773, %v679
    %v775 = vadd.f32 %v771, %v774
    %s776 = sld [smem:[#allocation10 + $0x18]]
    %v777 = vstv %s776
    %v778 = vmul.f32 %v777, %v648
    %v779 = vadd.f32 %v778, 0.0
    %s780 = sld [smem:[#allocation10 + $0x19]]
    %v781 = vstv %s780
    %v782 = vmul.f32 %v781, %v640
    %v783 = vadd.f32 %v779, %v782
    %s784 = sld [smem:[#allocation10 + $0x1a]]
    %v785 = vstv %s784
    %v786 = vmul.f32 %v785, %v652
    %v787 = vadd.f32 %v783, %v786
    %s788 = sld [smem:[#allocation10 + $0x1b]]
    %v789 = vstv %s788
    %v790 = vmul.f32 %v789, %v657
    %v791 = vadd.f32 %v787, %v790
    %s792 = sld [smem:[#allocation10 + $0x1c]]
    %v793 = vstv %s792
    %v794 = vmul.f32 %v793, %v641
    %v795 = vadd.f32 %v791, %v794
    %s796 = sld [smem:[#allocation10 + $0x1d]]
    %v797 = vstv %s796
    %v798 = vmul.f32 %v797, %v661
    %v799 = vadd.f32 %v795, %v798
    %s800 = sld [smem:[#allocation10 + $0x1e]]
    %v801 = vstv %s800
    %v802 = vmul.f32 %v801, %v666
    %v803 = vadd.f32 %v799, %v802
    %s804 = sld [smem:[#allocation10 + $0x1f]]
    %v805 = vstv %s804
    %v806 = vmul.f32 %v805, %v642
    %v807 = vadd.f32 %v803, %v806
    %s808 = sld [smem:[#allocation10 + $0x20]]
    %v809 = vstv %s808
    %v810 = vmul.f32 %v809, %v670
    %v811 = vadd.f32 %v807, %v810
    %s812 = sld [smem:[#allocation10 + $0x21]]
    %v813 = vstv %s812
    %v814 = vmul.f32 %v813, %v675
    %v815 = vadd.f32 %v811, %v814
    %s816 = sld [smem:[#allocation10 + $0x22]]
    %v817 = vstv %s816
    %v818 = vmul.f32 %v817, %v643
    %v819 = vadd.f32 %v815, %v818
    %s820 = sld [smem:[#allocation10 + $0x23]]
    %v821 = vstv %s820
    %v822 = vmul.f32 %v821, %v679
    %v823 = vadd.f32 %v819, %v822
    %s824 = sld [smem:[#allocation10 + $0x24]]
    %v825 = vstv %s824
    %v826 = vmul.f32 %v825, %v648
    %v827 = vadd.f32 %v826, 0.0
    %s828 = sld [smem:[#allocation10 + $0x25]]
    %v829 = vstv %s828
    %v830 = vmul.f32 %v829, %v640
    %v831 = vadd.f32 %v827, %v830
    %s832 = sld [smem:[#allocation10 + $0x26]]
    %v833 = vstv %s832
    %v834 = vmul.f32 %v833, %v652
    %v835 = vadd.f32 %v831, %v834
    %s836 = sld [smem:[#allocation10 + $0x27]]
    %v837 = vstv %s836
    %v838 = vmul.f32 %v837, %v657
    %v839 = vadd.f32 %v835, %v838
    %s840 = sld [smem:[#allocation10 + $0x28]]
    %v841 = vstv %s840
    %v842 = vmul.f32 %v841, %v641
    %v843 = vadd.f32 %v839, %v842
    %s844 = sld [smem:[#allocation10 + $0x29]]
    %v845 = vstv %s844
    %v846 = vmul.f32 %v845, %v661
    %v847 = vadd.f32 %v843, %v846
    %s848 = sld [smem:[#allocation10 + $0x2a]]
    %v849 = vstv %s848
    %v850 = vmul.f32 %v849, %v666
    %v851 = vadd.f32 %v847, %v850
    %s852 = sld [smem:[#allocation10 + $0x2b]]
    %v853 = vstv %s852
    %v854 = vmul.f32 %v853, %v642
    %v855 = vadd.f32 %v851, %v854
    %s856 = sld [smem:[#allocation10 + $0x2c]]
    %v857 = vstv %s856
    %v858 = vmul.f32 %v857, %v670
    %v859 = vadd.f32 %v855, %v858
    %s860 = sld [smem:[#allocation10 + $0x2d]]
    %v861 = vstv %s860
    %v862 = vmul.f32 %v861, %v675
    %v863 = vadd.f32 %v859, %v862
    %s864 = sld [smem:[#allocation10 + $0x2e]]
    %v865 = vstv %s864
    %v866 = vmul.f32 %v865, %v643
    %v867 = vadd.f32 %v863, %v866
    %s868 = sld [smem:[#allocation10 + $0x2f]]
    %v869 = vstv %s868
    %v870 = vmul.f32 %v869, %v679
    %v871 = vadd.f32 %v867, %v870
    %v872 = vsel %vm499, %v727, 0.0
    %873 = vadd.xlane.f32.xlu0 %v872
    %v874 = vpop.xlane.xlu0 %873
    %v875 = vrot.slane %v874, 4
    %v876 = vadd.f32 %v874, %v875
    %v877 = vrot.slane %v876, 2
    %v878 = vadd.f32 %v876, %v877
    %v879 = vrot.slane %v878, 1
    %v880 = vadd.f32 %v878, %v879
    %s881 = vtos %v880
    %v882 = vstv %s881
    %v883 = vmul.f32 %v882, 0.03125
    %v884 = vsub.f32 %v727, %v883
    %v885 = vmul.f32 %v884, %v884
    %v886 = vsel %vm499, %v885, 0.0
    %887 = vadd.xlane.f32.xlu0 %v886
    %v888 = vpop.xlane.xlu0 %887
    %v889 = vrot.slane %v888, 4
    %v890 = vadd.f32 %v888, %v889
    %v891 = vrot.slane %v890, 2
    %v892 = vadd.f32 %v890, %v891
    %v893 = vrot.slane %v892, 1
    %v894 = vadd.f32 %v892, %v893
    %s895 = vtos %v894
    %v896 = vstv %s895
    %v897 = vmul.f32 %v896, 0.03125
    %s898 = sld [smem:[#allocation12]]
    %v899 = vadd.f32 %v897, 1e-05
    %v900 = vrsqrt.pop %v899
    %v901 = vstv %s898
    %v902 = vmul.f32 %v901, %v900
    %v903 = vmul.f32 %v884, %v902
    %s904 = sld [smem:[#allocation13]]
    %v905 = vstv %s904
    %v906 = vadd.f32 %v903, %v905
    %v907 = vsel %vm499, %v775, 0.0
    %908 = vadd.xlane.f32.xlu0 %v907
    %v909 = vpop.xlane.xlu0 %908
    %v910 = vrot.slane %v909, 4
    %v911 = vadd.f32 %v909, %v910
    %v912 = vrot.slane %v911, 2
    %v913 = vadd.f32 %v911, %v912
    %v914 = vrot.slane %v913, 1
    %v915 = vadd.f32 %v913, %v914
    %s916 = vtos %v915
    %v917 = vstv %s916
    %v918 = vmul.f32 %v917, 0.03125
    %v919 = vsub.f32 %v775, %v918
    %v920 = vmul.f32 %v919, %v919
    %v921 = vsel %vm499, %v920, 0.0
    %922 = vadd.xlane.f32.xlu0 %v921
    %v923 = vpop.xlane.xlu0 %922
    %v924 = vrot.slane %v923, 4
    %v925 = vadd.f32 %v923, %v924
    %v926 = vrot.slane %v925, 2
    %v927 = vadd.f32 %v925, %v926
    %v928 = vrot.slane %v927, 1
    %v929 = vadd.f32 %v927, %v928
    %s930 = vtos %v929
    %v931 = vstv %s930
    %v932 = vmul.f32 %v931, 0.03125
    %s933 = sld [smem:[#allocation12 + $0x1]]
    %v934 = vadd.f32 %v932, 1e-05
    %v935 = vrsqrt.pop %v934
    %v936 = vstv %s933
    %v937 = vmul.f32 %v936, %v935
    %v938 = vmul.f32 %v919, %v937
    %s939 = sld [smem:[#allocation13 + $0x1]]
    %v940 = vstv %s939
    %v941 = vadd.f32 %v938, %v940
    %v942 = vsel %vm499, %v823, 0.0
    %943 = vadd.xlane.f32.xlu0 %v942
    %v944 = vpop.xlane.xlu0 %943
    %v945 = vrot.slane %v944, 4
    %v946 = vadd.f32 %v944, %v945
    %v947 = vrot.slane %v946, 2
    %v948 = vadd.f32 %v946, %v947
    %v949 = vrot.slane %v948, 1
    %v950 = vadd.f32 %v948, %v949
    %s951 = vtos %v950
    %v952 = vstv %s951
    %v953 = vmul.f32 %v952, 0.03125
    %v954 = vsub.f32 %v823, %v953
    %v955 = vmul.f32 %v954, %v954
    %v956 = vsel %vm499, %v955, 0.0
    %957 = vadd.xlane.f32.xlu0 %v956
    %v958 = vpop.xlane.xlu0 %957
    %v959 = vrot.slane %v958, 4
    %v960 = vadd.f32 %v958, %v959
    %v961 = vrot.slane %v960, 2
    %v962 = vadd.f32 %v960, %v961
    %v963 = vrot.slane %v962, 1
    %v964 = vadd.f32 %v962, %v963
    %s965 = vtos %v964
    %v966 = vstv %s965
    %v967 = vmul.f32 %v966, 0.03125
    %s968 = sld [smem:[#allocation12 + $0x2]]
    %v969 = vadd.f32 %v967, 1e-05
    %v970 = vrsqrt.pop %v969
    %v971 = vstv %s968
    %v972 = vmul.f32 %v971, %v970
    %v973 = vmul.f32 %v954, %v972
    %s974 = sld [smem:[#allocation13 + $0x2]]
    %v975 = vstv %s974
    %v976 = vadd.f32 %v973, %v975
    %v977 = vsel %vm499, %v871, 0.0
    %978 = vadd.xlane.f32.xlu0 %v977
    %v979 = vpop.xlane.xlu0 %978
    %v980 = vrot.slane %v979, 4
    %v981 = vadd.f32 %v979, %v980
    %v982 = vrot.slane %v981, 2
    %v983 = vadd.f32 %v981, %v982
    %v984 = vrot.slane %v983, 1
    %v985 = vadd.f32 %v983, %v984
    %s986 = vtos %v985
    %v987 = vstv %s986
    %v988 = vmul.f32 %v987, 0.03125
    %v989 = vsub.f32 %v871, %v988
    %v990 = vmul.f32 %v989, %v989
    %v991 = vsel %vm499, %v990, 0.0
    %992 = vadd.xlane.f32.xlu0 %v991
    %v993 = vpop.xlane.xlu0 %992
    %v994 = vrot.slane %v993, 4
    %v995 = vadd.f32 %v993, %v994
    %v996 = vrot.slane %v995, 2
    %v997 = vadd.f32 %v995, %v996
    %v998 = vrot.slane %v997, 1
    %v999 = vadd.f32 %v997, %v998
    %s1000 = vtos %v999
    %v1001 = vstv %s1000
    %v1002 = vmul.f32 %v1001, 0.03125
    %s1003 = sld [smem:[#allocation12 + $0x3]]
    %v1004 = vadd.f32 %v1002, 1e-05
    %v1005 = vrsqrt.pop %v1004
    %v1006 = vstv %s1003
    %v1007 = vmul.f32 %v1006, %v1005
    %v1008 = vmul.f32 %v989, %v1007
    %s1009 = sld [smem:[#allocation13 + $0x3]]
    %v1010 = vstv %s1009
    %v1011 = vadd.f32 %v1008, %v1010
    %v1013 = vadd.f32 %v906, %v118
    %v1014 = vmax.f32 %v1013, 0.0
    %v1016 = vadd.f32 %v941, %v130
    %v1017 = vmax.f32 %v1016, 0.0
    %v1019 = vadd.f32 %v976, %v143
    %v1020 = vmax.f32 %v1019, 0.0
    %v1022 = vadd.f32 %v1011, %v156
    %v1023 = vmax.f32 %v1022, 0.0
    %v1026 = vunpack.c.l.s4 1966171168
    %v1027 = vunpack.c.0.s8 %v1026
    %v1028 = vlaneseq
    %v1029 = vshrl.u32 %v1028, 7
    %v1030 = vsub.s32 %v1027, %v1029
    %v1031 = vrot.slane %v1014, %v1030
    %v1032 = vcombine.high %v1031, %v1031
    %v1034 = vunpack.c.l.s4 1966171168
    %v1035 = vunpack.c.0.s8 %v1034
    %v1036 = vlaneseq
    %v1037 = vshrl.u32 %v1036, 7
    %v1038 = vsub.s32 %v1035, %v1037
    %v1039 = vrot.slane %v1031, %v1038
    %v1041 = vunpack.c.l.s4 1966171168
    %v1042 = vunpack.c.0.s8 %v1041
    %v1043 = vlaneseq
    %v1044 = vshrl.u32 %v1043, 7
    %v1045 = vsub.s32 %v1042, %v1044
    %v1046 = vrot.slane %v1032, %v1045
    %v1051 = vunpack.c.l.s4 1966171168
    %v1052 = vunpack.c.0.s8 %v1051
    %v1053 = vlaneseq
    %v1054 = vshrl.u32 %v1053, 7
    %v1055 = vsub.s32 %v1052, %v1054
    %v1056 = vrot.slane %v1017, %v1055
    %v1057 = vcombine.high %v1056, %v1056
    %v1059 = vunpack.c.l.s4 1966171168
    %v1060 = vunpack.c.0.s8 %v1059
    %v1061 = vlaneseq
    %v1062 = vshrl.u32 %v1061, 7
    %v1063 = vsub.s32 %v1060, %v1062
    %v1064 = vrot.slane %v1056, %v1063
    %v1066 = vunpack.c.l.s4 1966171168
    %v1067 = vunpack.c.0.s8 %v1066
    %v1068 = vlaneseq
    %v1069 = vshrl.u32 %v1068, 7
    %v1070 = vsub.s32 %v1067, %v1069
    %v1071 = vrot.slane %v1057, %v1070
    %v1074 = vunpack.c.l.s4 1966171168
    %v1075 = vunpack.c.0.s8 %v1074
    %v1076 = vlaneseq
    %v1077 = vshrl.u32 %v1076, 7
    %v1078 = vsub.s32 %v1075, %v1077
    %v1079 = vrot.slane %v1020, %v1078
    %v1080 = vcombine.high %v1079, %v1079
    %v1082 = vunpack.c.l.s4 1966171168
    %v1083 = vunpack.c.0.s8 %v1082
    %v1084 = vlaneseq
    %v1085 = vshrl.u32 %v1084, 7
    %v1086 = vsub.s32 %v1083, %v1085
    %v1087 = vrot.slane %v1079, %v1086
    %v1089 = vunpack.c.l.s4 1966171168
    %v1090 = vunpack.c.0.s8 %v1089
    %v1091 = vlaneseq
    %v1092 = vshrl.u32 %v1091, 7
    %v1093 = vsub.s32 %v1090, %v1092
    %v1094 = vrot.slane %v1080, %v1093
    %v1097 = vunpack.c.l.s4 1966171168
    %v1098 = vunpack.c.0.s8 %v1097
    %v1099 = vlaneseq
    %v1100 = vshrl.u32 %v1099, 7
    %v1101 = vsub.s32 %v1098, %v1100
    %v1102 = vrot.slane %v1023, %v1101
    %v1103 = vcombine.high %v1102, %v1102
    %v1105 = vunpack.c.l.s4 1966171168
    %v1106 = vunpack.c.0.s8 %v1105
    %v1107 = vlaneseq
    %v1108 = vshrl.u32 %v1107, 7
    %v1109 = vsub.s32 %v1106, %v1108
    %v1110 = vrot.slane %v1102, %v1109
    %v1112 = vunpack.c.l.s4 1966171168
    %v1113 = vunpack.c.0.s8 %v1112
    %v1114 = vlaneseq
    %v1115 = vshrl.u32 %v1114, 7
    %v1116 = vsub.s32 %v1113, %v1115
    %v1117 = vrot.slane %v1103, %v1116
    %v1118 = vlaneseq
    %v1119 = vshrl.u32 %v1118, 7
    %v1120 = vsub.s32 0, %v1119
    %v1121 = vrot.slane %v1064, %v1120
    %v1122 = vlaneseq
    %v1123 = vshrl.u32 %v1122, 7
    %v1124 = vsub.s32 0, %v1123
    %v1125 = vrot.slane %v1071, %v1124
    %v1128 = vlaneseq
    %v1129 = vshrl.u32 %v1128, 7
    %v1130 = vsub.s32 0, %v1129
    %v1131 = vrot.slane %v1087, %v1130
    %v1132 = vlaneseq
    %v1133 = vshrl.u32 %v1132, 7
    %v1134 = vsub.s32 0, %v1133
    %v1135 = vrot.slane %v1094, %v1134
    %v1138 = vlaneseq
    %v1139 = vshrl.u32 %v1138, 7
    %v1140 = vsub.s32 0, %v1139
    %v1141 = vrot.slane %v1110, %v1140
    %v1142 = vlaneseq
    %v1143 = vshrl.u32 %v1142, 7
    %v1144 = vsub.s32 0, %v1143
    %v1145 = vrot.slane %v1117, %v1144
    %vm1148 = vcmask 1040384
    %v1149 = vsel %vm1148, %v1039, %v1121
    %v1150 = vsel %vm1148, %v1046, %v1125
    %vm1151 = vcmask 1041408
    %v1152 = vsel %vm1151, %v1149, %v1131
    %v1153 = vsel %vm1151, %v1150, %v1135
    %vm1154 = vcmask 1042432
    %v1155 = vsel %vm1154, %v1152, %v1141
    %v1156 = vsel %vm1154, %v1153, %v1145
    %vm1157 = vcmask 125952
    %1158 = vst.msk [vmem:[#allocation15] sm:$0xf] %vm1157, %v1155
    %1159 = vst.msk [vmem:[#allocation15 + $0x4] sm:$0xf] %vm1157, %v1156
    // Predicated region
    $region58: #{tpu_custom_call.1} parent=1 // pred_check
      _
    $region59: #{tpu_custom_call.1} parent=1 // pred_check_branch
      %1161 = sbr.rel (0) target = $region61
    $region60: #{tpu_custom_call.1} parent=1 // pred_region
      %s1163 = ssub.s32 128, 128
      %1164 = vsyncadd [#allocation4], %s1163
      %s1165 = sshll.u32 [#allocation15], 4
      %s1166 = int_to_ptr.vmem [resolvable:$true] %s1165
      %1171 = dma.vmem_to_hbm [thread:$0]  %s1166, 128, %s7, [#allocation4], 64, 64, 4
    $region61: #{tpu_custom_call.1} parent=1 // pred_fallthru
      _
    // Predicated region
    $region62: #{tpu_custom_call.1} parent=1 // pred_check
      _
    $region63: #{tpu_custom_call.1} parent=1 // pred_check_branch
      %1173 = sbr.rel (0) target = $region65
    $region64: #{tpu_custom_call.1} parent=1 // pred_region
      %1174 = dma.done [#allocation4], 128
    $region65: #{tpu_custom_call.1} parent=1 // pred_fallthru
      _
    %1175 = vsyncpa [#allocation3], 1
    %1176 = vsyncpa [#allocation4], 1
    %1177 = vsyncpa [#allocation5], 1
    %1178 = vsyncpa [#allocation8], 1
    %1179 = vsyncpa [#allocation11], 1
    %1180 = vsyncpa [#allocation14], 1

</llo_original>
